<compile_context>
chip_gen: v7x
topology: tpu7x:2x2x1
jax: 0.10.0
libtpu: 0.0.40
codegen_flags: <defaults>
</compile_context>

<pallas_src>
import functools

import jax
import jax.numpy as jnp
from jax.experimental import pallas as pl
from jax.experimental.pallas import tpu as pltpu


def _round_up(x, m):
    return ((x + m - 1) // m) * m


# ------------------------ fused LSTM + FC kernel ------------------------------
def lstm_fc_fused_kernel(x_ref, wih_ref, whh_ref, b_ref, wfc_ref, bfc_ref,
                         logits_ref, hn_ref, cn_ref, hall_sc,
                         *, seq_len, batch, hp):
    T, B, Hp = seq_len, batch, hp

    # Hoisted input projection: all timesteps in one MXU matmul, bias folded in.
    gx = (jnp.dot(x_ref[...], wih_ref[...], preferred_element_type=jnp.float32)
          + b_ref[...])                                       # (T*B, 4*Hp)

    whh = whh_ref[...]                                        # (Hp, 4*Hp), loop-invariant
    h = jnp.zeros((B, Hp), jnp.float32)
    c = jnp.zeros((B, Hp), jnp.float32)

    # Serial recurrence, fully unrolled at trace time (static T, static slices).
    for t in range(T):
        g = gx[t * B:(t + 1) * B, :] + jnp.dot(
            h, whh, preferred_element_type=jnp.float32)       # (B, 4*Hp)
        i_g = jax.nn.sigmoid(g[:, 0 * Hp:1 * Hp])             # 128-aligned lane slices
        f_g = jax.nn.sigmoid(g[:, 1 * Hp:2 * Hp])
        g_g = jnp.tanh(g[:, 2 * Hp:3 * Hp])
        o_g = jax.nn.sigmoid(g[:, 3 * Hp:4 * Hp])
        c = f_g * c + i_g * g_g
        h = o_g * jnp.tanh(c)
        hall_sc[t * B:(t + 1) * B, :] = h                     # hidden slab stays in VMEM

    hn_ref[...] = h
    cn_ref[...] = c

    # Fused FC over the whole (T*B, Hp) hidden slab -> one lane-dense store.
    logits_ref[...] = (jnp.dot(hall_sc[...], wfc_ref[...],
                               preferred_element_type=jnp.float32)
                       + bfc_ref[...]).astype(logits_ref.dtype)


# ---------------------------- model forward -----------------------------------
def lstm_model_forward(params, tokens):
    """tokens: (B, T) int32. Returns (logits (B,T,V), (h_n (1,B,H), c_n (1,B,H)))."""
    B, T = tokens.shape
    E = params["embedding"].shape[1]
    H = params["w_hh"].shape[1]
    V = params["w_fc"].shape[0]
    Hp = _round_up(H, 128)
    Vp = _round_up(V, 128)

    # Embedding gather directly in time-major flattened order: row index = t*B + b.
    x2d = jnp.take(params["embedding"],
                   jnp.transpose(tokens).reshape(-1), axis=0).astype(jnp.float32)  # (T*B, E)

    # --- zero-pad weights so each gate block / the vocab dim is a full 128-lane tile ---
    bias = params["b_ih"] + params["b_hh"]
    wih_t = jnp.zeros((E, 4 * Hp), jnp.float32)
    whh_t = jnp.zeros((Hp, 4 * Hp), jnp.float32)
    b_vec = jnp.zeros((1, 4 * Hp), jnp.float32)
    for g in range(4):
        wih_t = wih_t.at[:, g * Hp:g * Hp + H].set(params["w_ih"][g * H:(g + 1) * H, :].T)
        whh_t = whh_t.at[:H, g * Hp:g * Hp + H].set(params["w_hh"][g * H:(g + 1) * H, :].T)
        b_vec = b_vec.at[0, g * Hp:g * Hp + H].set(bias[g * H:(g + 1) * H])
    wfc_t = jnp.zeros((Hp, Vp), jnp.float32).at[:H, :V].set(params["w_fc"].T)
    bfc = jnp.zeros((1, Vp), jnp.float32).at[0, :V].set(params["b_fc"])

    kernel = functools.partial(lstm_fc_fused_kernel, seq_len=T, batch=B, hp=Hp)

    logits2d, h_n, c_n = pl.pallas_call(
        kernel,
        out_shape=(
            jax.ShapeDtypeStruct((T * B, Vp), jnp.float32),   # logits, time-major flat
            jax.ShapeDtypeStruct((B, Hp), jnp.float32),       # h_n (padded)
            jax.ShapeDtypeStruct((B, Hp), jnp.float32),       # c_n (padded)
        ),
        grid=(1,),                                            # single step: loop is in-kernel
        in_specs=[
            pl.BlockSpec((T * B, E), lambda i: (0, 0)),       # embedded inputs
            pl.BlockSpec((E, 4 * Hp), lambda i: (0, 0)),      # W_ih^T (padded)
            pl.BlockSpec((Hp, 4 * Hp), lambda i: (0, 0)),     # W_hh^T (padded)
            pl.BlockSpec((1, 4 * Hp), lambda i: (0, 0)),      # b_ih + b_hh (padded)
            pl.BlockSpec((Hp, Vp), lambda i: (0, 0)),         # W_fc^T (padded)
            pl.BlockSpec((1, Vp), lambda i: (0, 0)),          # b_fc (padded)
        ],
        out_specs=(
            pl.BlockSpec((T * B, Vp), lambda i: (0, 0)),
            pl.BlockSpec((B, Hp), lambda i: (0, 0)),
            pl.BlockSpec((B, Hp), lambda i: (0, 0)),
        ),
        scratch_shapes=[pltpu.VMEM((T * B, Hp), jnp.float32)],  # hidden-state slab
        compiler_params=pltpu.CompilerParams(
            dimension_semantics=("arbitrary",)),
    )(x2d, wih_t, whh_t, b_vec, wfc_t, bfc)

    logits = jnp.transpose(logits2d.reshape(T, B, Vp), (1, 0, 2))[:, :, :V]  # (B, T, V)
    return logits, (h_n[:, :H][None], c_n[:, :H][None])


# -------------------------- pure-JAX reference --------------------------------
def reference_forward(params, tokens):
    emb = jnp.take(params["embedding"], tokens, axis=0)        # (B, T, E)
    B, T, E = emb.shape
    H = params["w_hh"].shape[1]
    wih_t = params["w_ih"].T
    whh_t = params["w_hh"].T
    bias = params["b_ih"] + params["b_hh"]

    def step(carry, x_t):
        h, c = carry
        g = x_t @ wih_t + h @ whh_t + bias
        i = jax.nn.sigmoid(g[:, 0 * H:1 * H])
        f = jax.nn.sigmoid(g[:, 1 * H:2 * H])
        gg = jnp.tanh(g[:, 2 * H:3 * H])
        o = jax.nn.sigmoid(g[:, 3 * H:4 * H])
        c = f * c + i * gg
        h = o * jnp.tanh(c)
        return (h, c), h

    h0 = jnp.zeros((B, H), jnp.float32)
    c0 = jnp.zeros((B, H), jnp.float32)
    (h_n, c_n), hs = jax.lax.scan(step, (h0, c0), jnp.transpose(emb, (1, 0, 2)))
    out = jnp.transpose(hs, (1, 0, 2))                         # (B, T, H)
    logits = out @ params["w_fc"].T + params["b_fc"]
    return logits, (h_n[None], c_n[None])


# -------------------------------- main -----------------------------------------
if __name__ == "__main__":
    vocab_size = 100
    embedding_dim = 64
    hidden_dim = 32
    batch, seq = 2, 8

    key = jax.random.PRNGKey(0)
    keys = jax.random.split(key, 8)
    k = 1.0 / jnp.sqrt(hidden_dim)

    params = {
        "embedding": jax.random.normal(keys[0], (vocab_size, embedding_dim), jnp.float32),
        "w_ih": jax.random.uniform(keys[1], (4 * hidden_dim, embedding_dim), jnp.float32, -k, k),
        "w_hh": jax.random.uniform(keys[2], (4 * hidden_dim, hidden_dim), jnp.float32, -k, k),
        "b_ih": jax.random.uniform(keys[3], (4 * hidden_dim,), jnp.float32, -k, k),
        "b_hh": jax.random.uniform(keys[4], (4 * hidden_dim,), jnp.float32, -k, k),
        "w_fc": jax.random.uniform(keys[5], (vocab_size, hidden_dim), jnp.float32, -k, k),
        "b_fc": jax.random.uniform(keys[6], (vocab_size,), jnp.float32, -k, k),
    }

    tokens = jax.random.randint(keys[7], (batch, seq), 0, vocab_size, jnp.int32)

    logits, (h_n, c_n) = jax.block_until_ready(
        jax.jit(lstm_model_forward)(params, tokens))

    ref_logits, (ref_h, ref_c) = jax.block_until_ready(
        jax.jit(reference_forward)(params, tokens))

    assert logits.shape == (batch, seq, vocab_size)
    assert h_n.shape == (1, batch, hidden_dim) and c_n.shape == (1, batch, hidden_dim)
    assert jnp.allclose(logits, ref_logits, atol=2e-4, rtol=2e-4)
    assert jnp.allclose(h_n, ref_h, atol=2e-4, rtol=2e-4)
    assert jnp.allclose(c_n, ref_c, atol=2e-4, rtol=2e-4)

    print("KERNEL_OK")
</pallas_src>

<mosaic_0001>
module attributes {stable_mosaic.version = 11 : i64} {
  func.func @lstm_fc_fused_kernel(%arg0: i32, %arg1: memref<16x64xf32, #tpu.memory_space<vmem>>, %arg2: memref<64x512xf32, #tpu.memory_space<vmem>>, %arg3: memref<128x512xf32, #tpu.memory_space<vmem>>, %arg4: memref<1x512xf32, #tpu.memory_space<vmem>>, %arg5: memref<128x128xf32, #tpu.memory_space<vmem>>, %arg6: memref<1x128xf32, #tpu.memory_space<vmem>>, %arg7: memref<16x128xf32, #tpu.memory_space<vmem>>, %arg8: memref<2x128xf32, #tpu.memory_space<vmem>>, %arg9: memref<2x128xf32, #tpu.memory_space<vmem>>, %arg10: memref<16x128xf32, #tpu.memory_space<vmem>>) attributes {dimension_semantics = [#tpu.dimension_semantics<arbitrary>], iteration_bounds = array<i64: 1>, scalar_prefetch = 0 : i64, scratch_operands = 1 : i64, tpu.core_type = #tpu.core_type<tc>, window_params = [{pipeline_mode = #tpu.pipeline_mode<synchronous>, transform_indices = @transform_0, window_bounds = array<i64: 16, 64>}, {pipeline_mode = #tpu.pipeline_mode<synchronous>, transform_indices = @transform_1, window_bounds = array<i64: 64, 512>}, {pipeline_mode = #tpu.pipeline_mode<synchronous>, transform_indices = @transform_2, window_bounds = array<i64: 128, 512>}, {pipeline_mode = #tpu.pipeline_mode<synchronous>, transform_indices = @transform_3, window_bounds = array<i64: 1, 512>}, {pipeline_mode = #tpu.pipeline_mode<synchronous>, transform_indices = @transform_4, window_bounds = array<i64: 128, 128>}, {pipeline_mode = #tpu.pipeline_mode<synchronous>, transform_indices = @transform_5, window_bounds = array<i64: 1, 128>}, {pipeline_mode = #tpu.pipeline_mode<synchronous>, transform_indices = @transform_6, window_bounds = array<i64: 16, 128>}, {pipeline_mode = #tpu.pipeline_mode<synchronous>, transform_indices = @transform_7, window_bounds = array<i64: 2, 128>}, {pipeline_mode = #tpu.pipeline_mode<synchronous>, transform_indices = @transform_8, window_bounds = array<i64: 2, 128>}]} {
    %c0 = arith.constant 0 : index
    %c0_0 = arith.constant 0 : index
    %0 = vector.load %arg1[%c0, %c0_0] : memref<16x64xf32, #tpu.memory_space<vmem>>, vector<16x64xf32>
    %c0_1 = arith.constant 0 : index
    %c0_2 = arith.constant 0 : index
    %1 = vector.load %arg2[%c0_1, %c0_2] : memref<64x512xf32, #tpu.memory_space<vmem>>, vector<64x512xf32>
    %cst = arith.constant dense<0.000000e+00> : vector<16x512xf32>
    %2 = tpu.matmul %0, %1, %cst {dimension_numbers = #tpu.dot_dimension_numbers<[1], [0], [0], [1], [0, 0, 1, 1], [], []>} : vector<16x64xf32>, vector<64x512xf32>, vector<16x512xf32> -> vector<16x512xf32>
    %c0_3 = arith.constant 0 : index
    %c0_4 = arith.constant 0 : index
    %3 = vector.load %arg4[%c0_3, %c0_4] : memref<1x512xf32, #tpu.memory_space<vmem>>, vector<1x512xf32>
    %4 = vector.broadcast %3 : vector<1x512xf32> to vector<16x512xf32>
    %5 = arith.addf %2, %4 : vector<16x512xf32>
    %c0_5 = arith.constant 0 : index
    %c0_6 = arith.constant 0 : index
    %6 = vector.load %arg3[%c0_5, %c0_6] : memref<128x512xf32, #tpu.memory_space<vmem>>, vector<128x512xf32>
    %cst_7 = arith.constant 0.000000e+00 : f32
    %7 = vector.broadcast %cst_7 : f32 to vector<2x128xf32>
    %cst_8 = arith.constant 0.000000e+00 : f32
    %8 = vector.broadcast %cst_8 : f32 to vector<2x128xf32>
    %9 = vector.extract_strided_slice %5 {offsets = [0, 0], sizes = [2, 512], strides = [1, 1]} : vector<16x512xf32> to vector<2x512xf32>
    %cst_9 = arith.constant dense<0.000000e+00> : vector<2x512xf32>
    %10 = tpu.matmul %7, %6, %cst_9 {dimension_numbers = #tpu.dot_dimension_numbers<[1], [0], [0], [1], [0, 0, 1, 1], [], []>} : vector<2x128xf32>, vector<128x512xf32>, vector<2x512xf32> -> vector<2x512xf32>
    %11 = arith.addf %9, %10 : vector<2x512xf32>
    %12 = vector.extract_strided_slice %11 {offsets = [0, 0], sizes = [2, 128], strides = [1, 1]} : vector<2x512xf32> to vector<2x128xf32>
    %13 = arith.negf %12 : vector<2x128xf32>
    %14 = math.exp %13 : vector<2x128xf32>
    %cst_10 = arith.constant 1.000000e+00 : f32
    %15 = vector.broadcast %cst_10 : f32 to vector<2x128xf32>
    %16 = arith.addf %15, %14 : vector<2x128xf32>
    %17 = arith.divf %15, %16 : vector<2x128xf32>
    %18 = vector.extract_strided_slice %11 {offsets = [0, 128], sizes = [2, 128], strides = [1, 1]} : vector<2x512xf32> to vector<2x128xf32>
    %19 = arith.negf %18 : vector<2x128xf32>
    %20 = math.exp %19 : vector<2x128xf32>
    %cst_11 = arith.constant 1.000000e+00 : f32
    %21 = vector.broadcast %cst_11 : f32 to vector<2x128xf32>
    %22 = arith.addf %21, %20 : vector<2x128xf32>
    %23 = arith.divf %21, %22 : vector<2x128xf32>
    %24 = vector.extract_strided_slice %11 {offsets = [0, 256], sizes = [2, 128], strides = [1, 1]} : vector<2x512xf32> to vector<2x128xf32>
    %25 = math.tanh %24 : vector<2x128xf32>
    %26 = vector.extract_strided_slice %11 {offsets = [0, 384], sizes = [2, 128], strides = [1, 1]} : vector<2x512xf32> to vector<2x128xf32>
    %27 = arith.negf %26 : vector<2x128xf32>
    %28 = math.exp %27 : vector<2x128xf32>
    %cst_12 = arith.constant 1.000000e+00 : f32
    %29 = vector.broadcast %cst_12 : f32 to vector<2x128xf32>
    %30 = arith.addf %29, %28 : vector<2x128xf32>
    %31 = arith.divf %29, %30 : vector<2x128xf32>
    %32 = arith.mulf %23, %8 : vector<2x128xf32>
    %33 = arith.mulf %17, %25 : vector<2x128xf32>
    %34 = arith.addf %32, %33 : vector<2x128xf32>
    %35 = math.tanh %34 : vector<2x128xf32>
    %36 = arith.mulf %31, %35 : vector<2x128xf32>
    %c0_13 = arith.constant 0 : index
    %c0_14 = arith.constant 0 : index
    %37 = vector.load %arg10[%c0_13, %c0_14] : memref<16x128xf32, #tpu.memory_space<vmem>>, vector<2x128xf32>
    tpu.vector_store %arg10[%c0_13, %c0_14], %36 {strides = array<i32>} : memref<16x128xf32, #tpu.memory_space<vmem>>, vector<2x128xf32>,
    %38 = vector.extract_strided_slice %5 {offsets = [2, 0], sizes = [2, 512], strides = [1, 1]} : vector<16x512xf32> to vector<2x512xf32>
    %cst_15 = arith.constant dense<0.000000e+00> : vector<2x512xf32>
    %39 = tpu.matmul %36, %6, %cst_15 {dimension_numbers = #tpu.dot_dimension_numbers<[1], [0], [0], [1], [0, 0, 1, 1], [], []>} : vector<2x128xf32>, vector<128x512xf32>, vector<2x512xf32> -> vector<2x512xf32>
    %40 = arith.addf %38, %39 : vector<2x512xf32>
    %41 = vector.extract_strided_slice %40 {offsets = [0, 0], sizes = [2, 128], strides = [1, 1]} : vector<2x512xf32> to vector<2x128xf32>
    %42 = arith.negf %41 : vector<2x128xf32>
    %43 = math.exp %42 : vector<2x128xf32>
    %cst_16 = arith.constant 1.000000e+00 : f32
    %44 = vector.broadcast %cst_16 : f32 to vector<2x128xf32>
    %45 = arith.addf %44, %43 : vector<2x128xf32>
    %46 = arith.divf %44, %45 : vector<2x128xf32>
    %47 = vector.extract_strided_slice %40 {offsets = [0, 128], sizes = [2, 128], strides = [1, 1]} : vector<2x512xf32> to vector<2x128xf32>
    %48 = arith.negf %47 : vector<2x128xf32>
    %49 = math.exp %48 : vector<2x128xf32>
    %cst_17 = arith.constant 1.000000e+00 : f32
    %50 = vector.broadcast %cst_17 : f32 to vector<2x128xf32>
    %51 = arith.addf %50, %49 : vector<2x128xf32>
    %52 = arith.divf %50, %51 : vector<2x128xf32>
    %53 = vector.extract_strided_slice %40 {offsets = [0, 256], sizes = [2, 128], strides = [1, 1]} : vector<2x512xf32> to vector<2x128xf32>
    %54 = math.tanh %53 : vector<2x128xf32>
    %55 = vector.extract_strided_slice %40 {offsets = [0, 384], sizes = [2, 128], strides = [1, 1]} : vector<2x512xf32> to vector<2x128xf32>
    %56 = arith.negf %55 : vector<2x128xf32>
    %57 = math.exp %56 : vector<2x128xf32>
    %cst_18 = arith.constant 1.000000e+00 : f32
    %58 = vector.broadcast %cst_18 : f32 to vector<2x128xf32>
    %59 = arith.addf %58, %57 : vector<2x128xf32>
    %60 = arith.divf %58, %59 : vector<2x128xf32>
    %61 = arith.mulf %52, %34 : vector<2x128xf32>
    %62 = arith.mulf %46, %54 : vector<2x128xf32>
    %63 = arith.addf %61, %62 : vector<2x128xf32>
    %64 = math.tanh %63 : vector<2x128xf32>
    %65 = arith.mulf %60, %64 : vector<2x128xf32>
    %c2 = arith.constant 2 : index
    %c0_19 = arith.constant 0 : index
    %66 = vector.load %arg10[%c2, %c0_19] : memref<16x128xf32, #tpu.memory_space<vmem>>, vector<2x128xf32>
    tpu.vector_store %arg10[%c2, %c0_19], %65 {strides = array<i32>} : memref<16x128xf32, #tpu.memory_space<vmem>>, vector<2x128xf32>,
    %67 = vector.extract_strided_slice %5 {offsets = [4, 0], sizes = [2, 512], strides = [1, 1]} : vector<16x512xf32> to vector<2x512xf32>
    %cst_20 = arith.constant dense<0.000000e+00> : vector<2x512xf32>
    %68 = tpu.matmul %65, %6, %cst_20 {dimension_numbers = #tpu.dot_dimension_numbers<[1], [0], [0], [1], [0, 0, 1, 1], [], []>} : vector<2x128xf32>, vector<128x512xf32>, vector<2x512xf32> -> vector<2x512xf32>
    %69 = arith.addf %67, %68 : vector<2x512xf32>
    %70 = vector.extract_strided_slice %69 {offsets = [0, 0], sizes = [2, 128], strides = [1, 1]} : vector<2x512xf32> to vector<2x128xf32>
    %71 = arith.negf %70 : vector<2x128xf32>
    %72 = math.exp %71 : vector<2x128xf32>
    %cst_21 = arith.constant 1.000000e+00 : f32
    %73 = vector.broadcast %cst_21 : f32 to vector<2x128xf32>
    %74 = arith.addf %73, %72 : vector<2x128xf32>
    %75 = arith.divf %73, %74 : vector<2x128xf32>
    %76 = vector.extract_strided_slice %69 {offsets = [0, 128], sizes = [2, 128], strides = [1, 1]} : vector<2x512xf32> to vector<2x128xf32>
    %77 = arith.negf %76 : vector<2x128xf32>
    %78 = math.exp %77 : vector<2x128xf32>
    %cst_22 = arith.constant 1.000000e+00 : f32
    %79 = vector.broadcast %cst_22 : f32 to vector<2x128xf32>
    %80 = arith.addf %79, %78 : vector<2x128xf32>
    %81 = arith.divf %79, %80 : vector<2x128xf32>
    %82 = vector.extract_strided_slice %69 {offsets = [0, 256], sizes = [2, 128], strides = [1, 1]} : vector<2x512xf32> to vector<2x128xf32>
    %83 = math.tanh %82 : vector<2x128xf32>
    %84 = vector.extract_strided_slice %69 {offsets = [0, 384], sizes = [2, 128], strides = [1, 1]} : vector<2x512xf32> to vector<2x128xf32>
    %85 = arith.negf %84 : vector<2x128xf32>
    %86 = math.exp %85 : vector<2x128xf32>
    %cst_23 = arith.constant 1.000000e+00 : f32
    %87 = vector.broadcast %cst_23 : f32 to vector<2x128xf32>
    %88 = arith.addf %87, %86 : vector<2x128xf32>
    %89 = arith.divf %87, %88 : vector<2x128xf32>
    %90 = arith.mulf %81, %63 : vector<2x128xf32>
    %91 = arith.mulf %75, %83 : vector<2x128xf32>
    %92 = arith.addf %90, %91 : vector<2x128xf32>
    %93 = math.tanh %92 : vector<2x128xf32>
    %94 = arith.mulf %89, %93 : vector<2x128xf32>
    %c4 = arith.constant 4 : index
    %c0_24 = arith.constant 0 : index
    %95 = vector.load %arg10[%c4, %c0_24] : memref<16x128xf32, #tpu.memory_space<vmem>>, vector<2x128xf32>
    tpu.vector_store %arg10[%c4, %c0_24], %94 {strides = array<i32>} : memref<16x128xf32, #tpu.memory_space<vmem>>, vector<2x128xf32>,
    %96 = vector.extract_strided_slice %5 {offsets = [6, 0], sizes = [2, 512], strides = [1, 1]} : vector<16x512xf32> to vector<2x512xf32>
    %cst_25 = arith.constant dense<0.000000e+00> : vector<2x512xf32>
    %97 = tpu.matmul %94, %6, %cst_25 {dimension_numbers = #tpu.dot_dimension_numbers<[1], [0], [0], [1], [0, 0, 1, 1], [], []>} : vector<2x128xf32>, vector<128x512xf32>, vector<2x512xf32> -> vector<2x512xf32>
    %98 = arith.addf %96, %97 : vector<2x512xf32>
    %99 = vector.extract_strided_slice %98 {offsets = [0, 0], sizes = [2, 128], strides = [1, 1]} : vector<2x512xf32> to vector<2x128xf32>
    %100 = arith.negf %99 : vector<2x128xf32>
    %101 = math.exp %100 : vector<2x128xf32>
    %cst_26 = arith.constant 1.000000e+00 : f32
    %102 = vector.broadcast %cst_26 : f32 to vector<2x128xf32>
    %103 = arith.addf %102, %101 : vector<2x128xf32>
    %104 = arith.divf %102, %103 : vector<2x128xf32>
    %105 = vector.extract_strided_slice %98 {offsets = [0, 128], sizes = [2, 128], strides = [1, 1]} : vector<2x512xf32> to vector<2x128xf32>
    %106 = arith.negf %105 : vector<2x128xf32>
    %107 = math.exp %106 : vector<2x128xf32>
    %cst_27 = arith.constant 1.000000e+00 : f32
    %108 = vector.broadcast %cst_27 : f32 to vector<2x128xf32>
    %109 = arith.addf %108, %107 : vector<2x128xf32>
    %110 = arith.divf %108, %109 : vector<2x128xf32>
    %111 = vector.extract_strided_slice %98 {offsets = [0, 256], sizes = [2, 128], strides = [1, 1]} : vector<2x512xf32> to vector<2x128xf32>
    %112 = math.tanh %111 : vector<2x128xf32>
    %113 = vector.extract_strided_slice %98 {offsets = [0, 384], sizes = [2, 128], strides = [1, 1]} : vector<2x512xf32> to vector<2x128xf32>
    %114 = arith.negf %113 : vector<2x128xf32>
    %115 = math.exp %114 : vector<2x128xf32>
    %cst_28 = arith.constant 1.000000e+00 : f32
    %116 = vector.broadcast %cst_28 : f32 to vector<2x128xf32>
    %117 = arith.addf %116, %115 : vector<2x128xf32>
    %118 = arith.divf %116, %117 : vector<2x128xf32>
    %119 = arith.mulf %110, %92 : vector<2x128xf32>
    %120 = arith.mulf %104, %112 : vector<2x128xf32>
    %121 = arith.addf %119, %120 : vector<2x128xf32>
    %122 = math.tanh %121 : vector<2x128xf32>
    %123 = arith.mulf %118, %122 : vector<2x128xf32>
    %c6 = arith.constant 6 : index
    %c0_29 = arith.constant 0 : index
    %124 = vector.load %arg10[%c6, %c0_29] : memref<16x128xf32, #tpu.memory_space<vmem>>, vector<2x128xf32>
    tpu.vector_store %arg10[%c6, %c0_29], %123 {strides = array<i32>} : memref<16x128xf32, #tpu.memory_space<vmem>>, vector<2x128xf32>,
    %125 = vector.extract_strided_slice %5 {offsets = [8, 0], sizes = [2, 512], strides = [1, 1]} : vector<16x512xf32> to vector<2x512xf32>
    %cst_30 = arith.constant dense<0.000000e+00> : vector<2x512xf32>
    %126 = tpu.matmul %123, %6, %cst_30 {dimension_numbers = #tpu.dot_dimension_numbers<[1], [0], [0], [1], [0, 0, 1, 1], [], []>} : vector<2x128xf32>, vector<128x512xf32>, vector<2x512xf32> -> vector<2x512xf32>
    %127 = arith.addf %125, %126 : vector<2x512xf32>
    %128 = vector.extract_strided_slice %127 {offsets = [0, 0], sizes = [2, 128], strides = [1, 1]} : vector<2x512xf32> to vector<2x128xf32>
    %129 = arith.negf %128 : vector<2x128xf32>
    %130 = math.exp %129 : vector<2x128xf32>
    %cst_31 = arith.constant 1.000000e+00 : f32
    %131 = vector.broadcast %cst_31 : f32 to vector<2x128xf32>
    %132 = arith.addf %131, %130 : vector<2x128xf32>
    %133 = arith.divf %131, %132 : vector<2x128xf32>
    %134 = vector.extract_strided_slice %127 {offsets = [0, 128], sizes = [2, 128], strides = [1, 1]} : vector<2x512xf32> to vector<2x128xf32>
    %135 = arith.negf %134 : vector<2x128xf32>
    %136 = math.exp %135 : vector<2x128xf32>
    %cst_32 = arith.constant 1.000000e+00 : f32
    %137 = vector.broadcast %cst_32 : f32 to vector<2x128xf32>
    %138 = arith.addf %137, %136 : vector<2x128xf32>
    %139 = arith.divf %137, %138 : vector<2x128xf32>
    %140 = vector.extract_strided_slice %127 {offsets = [0, 256], sizes = [2, 128], strides = [1, 1]} : vector<2x512xf32> to vector<2x128xf32>
    %141 = math.tanh %140 : vector<2x128xf32>
    %142 = vector.extract_strided_slice %127 {offsets = [0, 384], sizes = [2, 128], strides = [1, 1]} : vector<2x512xf32> to vector<2x128xf32>
    %143 = arith.negf %142 : vector<2x128xf32>
    %144 = math.exp %143 : vector<2x128xf32>
    %cst_33 = arith.constant 1.000000e+00 : f32
    %145 = vector.broadcast %cst_33 : f32 to vector<2x128xf32>
    %146 = arith.addf %145, %144 : vector<2x128xf32>
    %147 = arith.divf %145, %146 : vector<2x128xf32>
    %148 = arith.mulf %139, %121 : vector<2x128xf32>
    %149 = arith.mulf %133, %141 : vector<2x128xf32>
    %150 = arith.addf %148, %149 : vector<2x128xf32>
    %151 = math.tanh %150 : vector<2x128xf32>
    %152 = arith.mulf %147, %151 : vector<2x128xf32>
    %c8 = arith.constant 8 : index
    %c0_34 = arith.constant 0 : index
    %153 = vector.load %arg10[%c8, %c0_34] : memref<16x128xf32, #tpu.memory_space<vmem>>, vector<2x128xf32>
    tpu.vector_store %arg10[%c8, %c0_34], %152 {strides = array<i32>} : memref<16x128xf32, #tpu.memory_space<vmem>>, vector<2x128xf32>,
    %154 = vector.extract_strided_slice %5 {offsets = [10, 0], sizes = [2, 512], strides = [1, 1]} : vector<16x512xf32> to vector<2x512xf32>
    %cst_35 = arith.constant dense<0.000000e+00> : vector<2x512xf32>
    %155 = tpu.matmul %152, %6, %cst_35 {dimension_numbers = #tpu.dot_dimension_numbers<[1], [0], [0], [1], [0, 0, 1, 1], [], []>} : vector<2x128xf32>, vector<128x512xf32>, vector<2x512xf32> -> vector<2x512xf32>
    %156 = arith.addf %154, %155 : vector<2x512xf32>
    %157 = vector.extract_strided_slice %156 {offsets = [0, 0], sizes = [2, 128], strides = [1, 1]} : vector<2x512xf32> to vector<2x128xf32>
    %158 = arith.negf %157 : vector<2x128xf32>
    %159 = math.exp %158 : vector<2x128xf32>
    %cst_36 = arith.constant 1.000000e+00 : f32
    %160 = vector.broadcast %cst_36 : f32 to vector<2x128xf32>
    %161 = arith.addf %160, %159 : vector<2x128xf32>
    %162 = arith.divf %160, %161 : vector<2x128xf32>
    %163 = vector.extract_strided_slice %156 {offsets = [0, 128], sizes = [2, 128], strides = [1, 1]} : vector<2x512xf32> to vector<2x128xf32>
    %164 = arith.negf %163 : vector<2x128xf32>
    %165 = math.exp %164 : vector<2x128xf32>
    %cst_37 = arith.constant 1.000000e+00 : f32
    %166 = vector.broadcast %cst_37 : f32 to vector<2x128xf32>
    %167 = arith.addf %166, %165 : vector<2x128xf32>
    %168 = arith.divf %166, %167 : vector<2x128xf32>
    %169 = vector.extract_strided_slice %156 {offsets = [0, 256], sizes = [2, 128], strides = [1, 1]} : vector<2x512xf32> to vector<2x128xf32>
    %170 = math.tanh %169 : vector<2x128xf32>
    %171 = vector.extract_strided_slice %156 {offsets = [0, 384], sizes = [2, 128], strides = [1, 1]} : vector<2x512xf32> to vector<2x128xf32>
    %172 = arith.negf %171 : vector<2x128xf32>
    %173 = math.exp %172 : vector<2x128xf32>
    %cst_38 = arith.constant 1.000000e+00 : f32
    %174 = vector.broadcast %cst_38 : f32 to vector<2x128xf32>
    %175 = arith.addf %174, %173 : vector<2x128xf32>
    %176 = arith.divf %174, %175 : vector<2x128xf32>
    %177 = arith.mulf %168, %150 : vector<2x128xf32>
    %178 = arith.mulf %162, %170 : vector<2x128xf32>
    %179 = arith.addf %177, %178 : vector<2x128xf32>
    %180 = math.tanh %179 : vector<2x128xf32>
    %181 = arith.mulf %176, %180 : vector<2x128xf32>
    %c10 = arith.constant 10 : index
    %c0_39 = arith.constant 0 : index
    %182 = vector.load %arg10[%c10, %c0_39] : memref<16x128xf32, #tpu.memory_space<vmem>>, vector<2x128xf32>
    tpu.vector_store %arg10[%c10, %c0_39], %181 {strides = array<i32>} : memref<16x128xf32, #tpu.memory_space<vmem>>, vector<2x128xf32>,
    %183 = vector.extract_strided_slice %5 {offsets = [12, 0], sizes = [2, 512], strides = [1, 1]} : vector<16x512xf32> to vector<2x512xf32>
    %cst_40 = arith.constant dense<0.000000e+00> : vector<2x512xf32>
    %184 = tpu.matmul %181, %6, %cst_40 {dimension_numbers = #tpu.dot_dimension_numbers<[1], [0], [0], [1], [0, 0, 1, 1], [], []>} : vector<2x128xf32>, vector<128x512xf32>, vector<2x512xf32> -> vector<2x512xf32>
    %185 = arith.addf %183, %184 : vector<2x512xf32>
    %186 = vector.extract_strided_slice %185 {offsets = [0, 0], sizes = [2, 128], strides = [1, 1]} : vector<2x512xf32> to vector<2x128xf32>
    %187 = arith.negf %186 : vector<2x128xf32>
    %188 = math.exp %187 : vector<2x128xf32>
    %cst_41 = arith.constant 1.000000e+00 : f32
    %189 = vector.broadcast %cst_41 : f32 to vector<2x128xf32>
    %190 = arith.addf %189, %188 : vector<2x128xf32>
    %191 = arith.divf %189, %190 : vector<2x128xf32>
    %192 = vector.extract_strided_slice %185 {offsets = [0, 128], sizes = [2, 128], strides = [1, 1]} : vector<2x512xf32> to vector<2x128xf32>
    %193 = arith.negf %192 : vector<2x128xf32>
    %194 = math.exp %193 : vector<2x128xf32>
    %cst_42 = arith.constant 1.000000e+00 : f32
    %195 = vector.broadcast %cst_42 : f32 to vector<2x128xf32>
    %196 = arith.addf %195, %194 : vector<2x128xf32>
    %197 = arith.divf %195, %196 : vector<2x128xf32>
    %198 = vector.extract_strided_slice %185 {offsets = [0, 256], sizes = [2, 128], strides = [1, 1]} : vector<2x512xf32> to vector<2x128xf32>
    %199 = math.tanh %198 : vector<2x128xf32>
    %200 = vector.extract_strided_slice %185 {offsets = [0, 384], sizes = [2, 128], strides = [1, 1]} : vector<2x512xf32> to vector<2x128xf32>
    %201 = arith.negf %200 : vector<2x128xf32>
    %202 = math.exp %201 : vector<2x128xf32>
    %cst_43 = arith.constant 1.000000e+00 : f32
    %203 = vector.broadcast %cst_43 : f32 to vector<2x128xf32>
    %204 = arith.addf %203, %202 : vector<2x128xf32>
    %205 = arith.divf %203, %204 : vector<2x128xf32>
    %206 = arith.mulf %197, %179 : vector<2x128xf32>
    %207 = arith.mulf %191, %199 : vector<2x128xf32>
    %208 = arith.addf %206, %207 : vector<2x128xf32>
    %209 = math.tanh %208 : vector<2x128xf32>
    %210 = arith.mulf %205, %209 : vector<2x128xf32>
    %c12 = arith.constant 12 : index
    %c0_44 = arith.constant 0 : index
    %211 = vector.load %arg10[%c12, %c0_44] : memref<16x128xf32, #tpu.memory_space<vmem>>, vector<2x128xf32>
    tpu.vector_store %arg10[%c12, %c0_44], %210 {strides = array<i32>} : memref<16x128xf32, #tpu.memory_space<vmem>>, vector<2x128xf32>,
    %212 = vector.extract_strided_slice %5 {offsets = [14, 0], sizes = [2, 512], strides = [1, 1]} : vector<16x512xf32> to vector<2x512xf32>
    %cst_45 = arith.constant dense<0.000000e+00> : vector<2x512xf32>
    %213 = tpu.matmul %210, %6, %cst_45 {dimension_numbers = #tpu.dot_dimension_numbers<[1], [0], [0], [1], [0, 0, 1, 1], [], []>} : vector<2x128xf32>, vector<128x512xf32>, vector<2x512xf32> -> vector<2x512xf32>
    %214 = arith.addf %212, %213 : vector<2x512xf32>
    %215 = vector.extract_strided_slice %214 {offsets = [0, 0], sizes = [2, 128], strides = [1, 1]} : vector<2x512xf32> to vector<2x128xf32>
    %216 = arith.negf %215 : vector<2x128xf32>
    %217 = math.exp %216 : vector<2x128xf32>
    %cst_46 = arith.constant 1.000000e+00 : f32
    %218 = vector.broadcast %cst_46 : f32 to vector<2x128xf32>
    %219 = arith.addf %218, %217 : vector<2x128xf32>
    %220 = arith.divf %218, %219 : vector<2x128xf32>
    %221 = vector.extract_strided_slice %214 {offsets = [0, 128], sizes = [2, 128], strides = [1, 1]} : vector<2x512xf32> to vector<2x128xf32>
    %222 = arith.negf %221 : vector<2x128xf32>
    %223 = math.exp %222 : vector<2x128xf32>
    %cst_47 = arith.constant 1.000000e+00 : f32
    %224 = vector.broadcast %cst_47 : f32 to vector<2x128xf32>
    %225 = arith.addf %224, %223 : vector<2x128xf32>
    %226 = arith.divf %224, %225 : vector<2x128xf32>
    %227 = vector.extract_strided_slice %214 {offsets = [0, 256], sizes = [2, 128], strides = [1, 1]} : vector<2x512xf32> to vector<2x128xf32>
    %228 = math.tanh %227 : vector<2x128xf32>
    %229 = vector.extract_strided_slice %214 {offsets = [0, 384], sizes = [2, 128], strides = [1, 1]} : vector<2x512xf32> to vector<2x128xf32>
    %230 = arith.negf %229 : vector<2x128xf32>
    %231 = math.exp %230 : vector<2x128xf32>
    %cst_48 = arith.constant 1.000000e+00 : f32
    %232 = vector.broadcast %cst_48 : f32 to vector<2x128xf32>
    %233 = arith.addf %232, %231 : vector<2x128xf32>
    %234 = arith.divf %232, %233 : vector<2x128xf32>
    %235 = arith.mulf %226, %208 : vector<2x128xf32>
    %236 = arith.mulf %220, %228 : vector<2x128xf32>
    %237 = arith.addf %235, %236 : vector<2x128xf32>
    %238 = math.tanh %237 : vector<2x128xf32>
    %239 = arith.mulf %234, %238 : vector<2x128xf32>
    %c14 = arith.constant 14 : index
    %c0_49 = arith.constant 0 : index
    %240 = vector.load %arg10[%c14, %c0_49] : memref<16x128xf32, #tpu.memory_space<vmem>>, vector<2x128xf32>
    tpu.vector_store %arg10[%c14, %c0_49], %239 {strides = array<i32>} : memref<16x128xf32, #tpu.memory_space<vmem>>, vector<2x128xf32>,
    %c0_50 = arith.constant 0 : index
    %c0_51 = arith.constant 0 : index
    %241 = vector.load %arg8[%c0_50, %c0_51] : memref<2x128xf32, #tpu.memory_space<vmem>>, vector<2x128xf32>
    tpu.vector_store %arg8[%c0_50, %c0_51], %239 {strides = array<i32>} : memref<2x128xf32, #tpu.memory_space<vmem>>, vector<2x128xf32>,
    %c0_52 = arith.constant 0 : index
    %c0_53 = arith.constant 0 : index
    %242 = vector.load %arg9[%c0_52, %c0_53] : memref<2x128xf32, #tpu.memory_space<vmem>>, vector<2x128xf32>
    tpu.vector_store %arg9[%c0_52, %c0_53], %237 {strides = array<i32>} : memref<2x128xf32, #tpu.memory_space<vmem>>, vector<2x128xf32>,
    %c0_54 = arith.constant 0 : index
    %c0_55 = arith.constant 0 : index
    %243 = vector.load %arg10[%c0_54, %c0_55] : memref<16x128xf32, #tpu.memory_space<vmem>>, vector<16x128xf32>
    %c0_56 = arith.constant 0 : index
    %c0_57 = arith.constant 0 : index
    %244 = vector.load %arg5[%c0_56, %c0_57] : memref<128x128xf32, #tpu.memory_space<vmem>>, vector<128x128xf32>
    %cst_58 = arith.constant dense<0.000000e+00> : vector<16x128xf32>
    %245 = tpu.matmul %243, %244, %cst_58 {dimension_numbers = #tpu.dot_dimension_numbers<[1], [0], [0], [1], [0, 0, 1, 1], [], []>} : vector<16x128xf32>, vector<128x128xf32>, vector<16x128xf32> -> vector<16x128xf32>
    %c0_59 = arith.constant 0 : index
    %c0_60 = arith.constant 0 : index
    %246 = vector.load %arg6[%c0_59, %c0_60] : memref<1x128xf32, #tpu.memory_space<vmem>>, vector<1x128xf32>
    %247 = vector.broadcast %246 : vector<1x128xf32> to vector<16x128xf32>
    %248 = arith.addf %245, %247 : vector<16x128xf32>
    %c0_61 = arith.constant 0 : index
    %c0_62 = arith.constant 0 : index
    %249 = vector.load %arg7[%c0_61, %c0_62] : memref<16x128xf32, #tpu.memory_space<vmem>>, vector<16x128xf32>
    tpu.vector_store %arg7[%c0_61, %c0_62], %248 {strides = array<i32>} : memref<16x128xf32, #tpu.memory_space<vmem>>, vector<16x128xf32>,
    return
  }
  func.func @transform_0(%arg0: i32) -> (i32, i32) {
    %c0_i32 = arith.constant 0 : i32
    %c0_i32_0 = arith.constant 0 : i32
    %c0_i32_1 = arith.constant 0 : i32
    return %c0_i32, %c0_i32_0 : i32, i32
  }
  func.func @transform_1(%arg0: i32) -> (i32, i32) {
    %c0_i32 = arith.constant 0 : i32
    %c0_i32_0 = arith.constant 0 : i32
    %c0_i32_1 = arith.constant 0 : i32
    return %c0_i32, %c0_i32_0 : i32, i32
  }
  func.func @transform_2(%arg0: i32) -> (i32, i32) {
    %c0_i32 = arith.constant 0 : i32
    %c0_i32_0 = arith.constant 0 : i32
    %c0_i32_1 = arith.constant 0 : i32
    return %c0_i32, %c0_i32_0 : i32, i32
  }
  func.func @transform_3(%arg0: i32) -> (i32, i32) {
    %c0_i32 = arith.constant 0 : i32
    %c0_i32_0 = arith.constant 0 : i32
    %c0_i32_1 = arith.constant 0 : i32
    return %c0_i32, %c0_i32_0 : i32, i32
  }
  func.func @transform_4(%arg0: i32) -> (i32, i32) {
    %c0_i32 = arith.constant 0 : i32
    %c0_i32_0 = arith.constant 0 : i32
    %c0_i32_1 = arith.constant 0 : i32
    return %c0_i32, %c0_i32_0 : i32, i32
  }
  func.func @transform_5(%arg0: i32) -> (i32, i32) {
    %c0_i32 = arith.constant 0 : i32
    %c0_i32_0 = arith.constant 0 : i32
    %c0_i32_1 = arith.constant 0 : i32
    return %c0_i32, %c0_i32_0 : i32, i32
  }
  func.func @transform_6(%arg0: i32) -> (i32, i32) {
    %c0_i32 = arith.constant 0 : i32
    %c0_i32_0 = arith.constant 0 : i32
    %c0_i32_1 = arith.constant 0 : i32
    return %c0_i32, %c0_i32_0 : i32, i32
  }
  func.func @transform_7(%arg0: i32) -> (i32, i32) {
    %c0_i32 = arith.constant 0 : i32
    %c0_i32_0 = arith.constant 0 : i32
    %c0_i32_1 = arith.constant 0 : i32
    return %c0_i32, %c0_i32_0 : i32, i32
  }
  func.func @transform_8(%arg0: i32) -> (i32, i32) {
    %c0_i32 = arith.constant 0 : i32
    %c0_i32_0 = arith.constant 0 : i32
    %c0_i32_1 = arith.constant 0 : i32
    return %c0_i32, %c0_i32_0 : i32, i32
  }
}

</mosaic_0001>

<llo_original>
// kernel: lstm_model_forward.1
$region0: #{lstm_model_forward.1}
  #allocation0 [shape = 'u32[]', space=smem, size = 0x4, offset = 0x4, fixed_abs, tag = 'smem constant byte address 0x4 - core index']
  #allocation1 [shape = 'u32[144,128]{1,0:T(1,128)}', space=vmem, size = 0x12000, scoped, tag = 'internal scratch']
  #allocation2 [shape = 'f32[16,128]{1,0:T(8,128)}', space=vmem, size = 0x2000, scoped, tag = 'scratch operand']
  %s0 = inlined_call_operand.vmem [shape: f32[16,64], index: 0, kind: input, shape index: {}]
  %s1 = inlined_call_operand.vmem [shape: f32[64,512], index: 1, kind: input, shape index: {}]
  %s2 = inlined_call_operand.vmem [shape: f32[128,512], index: 2, kind: input, shape index: {}]
  %s3 = inlined_call_operand.vmem [shape: f32[1,512], index: 3, kind: input, shape index: {}]
  %s4 = inlined_call_operand.vmem [shape: f32[128,128], index: 4, kind: input, shape index: {}]
  %s5 = inlined_call_operand.vmem [shape: f32[1,128], index: 5, kind: input, shape index: {}]
  %s6 = inlined_call_operand.vmem [shape: f32[16,128], index: 6, kind: output, shape index: {0}]
  %s7 = inlined_call_operand.vmem [shape: f32[2,128], index: 7, kind: output, shape index: {1}]
  %s8 = inlined_call_operand.vmem [shape: f32[2,128], index: 8, kind: output, shape index: {2}]
  %9 = xla_tuple %s6, %s7, %s8
  %s10 = sld [smem:[#allocation0]]
  $region50: #{lstm_model_forward.1} parent=0
    _
  %s12 = ssub.s32 1, %s10
  %s13 = scalar_select 0, %s12, %s10
  // Predicated region
  $region2: #{lstm_model_forward.1} parent=0 // pred_check
    _
  $region3: #{lstm_model_forward.1} parent=0 // pred_check_branch
    %15 = sbr.rel (0) target = $region5
  $region4: #{lstm_model_forward.1} parent=0 // pred_region
    _
  $region5: #{lstm_model_forward.1} parent=0 // pred_fallthru
    _
  // Predicated region
  $region6: #{lstm_model_forward.1} parent=0 // pred_check
    _
  $region7: #{lstm_model_forward.1} parent=0 // pred_check_branch
    %17 = sbr.rel (0) target = $region9
  $region8: #{lstm_model_forward.1} parent=0 // pred_region
    _
  $region9: #{lstm_model_forward.1} parent=0 // pred_fallthru
    _
  // Predicated region
  $region10: #{lstm_model_forward.1} parent=0 // pred_check
    _
  $region11: #{lstm_model_forward.1} parent=0 // pred_check_branch
    %19 = sbr.rel (0) target = $region13
  $region12: #{lstm_model_forward.1} parent=0 // pred_region
    _
  $region13: #{lstm_model_forward.1} parent=0 // pred_fallthru
    _
  // Predicated region
  $region14: #{lstm_model_forward.1} parent=0 // pred_check
    _
  $region15: #{lstm_model_forward.1} parent=0 // pred_check_branch
    %21 = sbr.rel (0) target = $region17
  $region16: #{lstm_model_forward.1} parent=0 // pred_region
    _
  $region17: #{lstm_model_forward.1} parent=0 // pred_fallthru
    _
  // Predicated region
  $region18: #{lstm_model_forward.1} parent=0 // pred_check
    _
  $region19: #{lstm_model_forward.1} parent=0 // pred_check_branch
    %23 = sbr.rel (0) target = $region21
  $region20: #{lstm_model_forward.1} parent=0 // pred_region
    _
  $region21: #{lstm_model_forward.1} parent=0 // pred_fallthru
    _
  // Predicated region
  $region22: #{lstm_model_forward.1} parent=0 // pred_check
    _
  $region23: #{lstm_model_forward.1} parent=0 // pred_check_branch
    %25 = sbr.rel (0) target = $region25
  $region24: #{lstm_model_forward.1} parent=0 // pred_region
    _
  $region25: #{lstm_model_forward.1} parent=0 // pred_fallthru
    _
  %v26 = vld [vmem:[%s0] sm:$0xff]
  %v27 = vld [vmem:[%s0 + $0x8] sm:$0xff]
  %v28 = vld [vmem:[%s1] sm:$0xff]
  %v29 = vld [vmem:[%s1 + $0x8] sm:$0xff]
  %v30 = vld [vmem:[%s1 + $0x10] sm:$0xff]
  %v31 = vld [vmem:[%s1 + $0x18] sm:$0xff]
  %v32 = vld [vmem:[%s1 + $0x20] sm:$0xff]
  %v33 = vld [vmem:[%s1 + $0x28] sm:$0xff]
  %v34 = vld [vmem:[%s1 + $0x30] sm:$0xff]
  %v35 = vld [vmem:[%s1 + $0x38] sm:$0xff]
  %v36 = vld [vmem:[%s1 + $0x40] sm:$0xff]
  %v37 = vld [vmem:[%s1 + $0x48] sm:$0xff]
  %v38 = vld [vmem:[%s1 + $0x50] sm:$0xff]
  %v39 = vld [vmem:[%s1 + $0x58] sm:$0xff]
  %v40 = vld [vmem:[%s1 + $0x60] sm:$0xff]
  %v41 = vld [vmem:[%s1 + $0x68] sm:$0xff]
  %v42 = vld [vmem:[%s1 + $0x70] sm:$0xff]
  %v43 = vld [vmem:[%s1 + $0x78] sm:$0xff]
  %v44 = vld [vmem:[%s1 + $0x80] sm:$0xff]
  %v45 = vld [vmem:[%s1 + $0x88] sm:$0xff]
  %v46 = vld [vmem:[%s1 + $0x90] sm:$0xff]
  %v47 = vld [vmem:[%s1 + $0x98] sm:$0xff]
  %v48 = vld [vmem:[%s1 + $0xa0] sm:$0xff]
  %v49 = vld [vmem:[%s1 + $0xa8] sm:$0xff]
  %v50 = vld [vmem:[%s1 + $0xb0] sm:$0xff]
  %v51 = vld [vmem:[%s1 + $0xb8] sm:$0xff]
  %v52 = vld [vmem:[%s1 + $0xc0] sm:$0xff]
  %v53 = vld [vmem:[%s1 + $0xc8] sm:$0xff]
  %v54 = vld [vmem:[%s1 + $0xd0] sm:$0xff]
  %v55 = vld [vmem:[%s1 + $0xd8] sm:$0xff]
  %v56 = vld [vmem:[%s1 + $0xe0] sm:$0xff]
  %v57 = vld [vmem:[%s1 + $0xe8] sm:$0xff]
  %v58 = vld [vmem:[%s1 + $0xf0] sm:$0xff]
  %v59 = vld [vmem:[%s1 + $0xf8] sm:$0xff]
  %v60 = vld [vmem:[%s3] sm:$0xf]
  %v62 = vlaneseq
  %v63 = vshrl.u32 %v62, 7
  %v64 = vsub.s32 0, %v63
  %v65 = vrot.slane %v60, %v64
  %v66 = vlaneseq
  %v67 = vshrl.u32 %v66, 7
  %v68 = vsub.s32 1, %v67
  %v69 = vrot.slane %v60, %v68
  %v70 = vlaneseq
  %v71 = vshrl.u32 %v70, 7
  %v72 = vsub.s32 2, %v71
  %v73 = vrot.slane %v60, %v72
  %v74 = vlaneseq
  %v75 = vshrl.u32 %v74, 7
  %v76 = vsub.s32 3, %v75
  %v77 = vrot.slane %v60, %v76
  %vm82 = vcmask 523264
  %v84 = vsel %vm82, %v26, 0
  %v87 = vsel %vm82, %v27, 0
  %89 = vmatprep.subr.mxu0 %v29
  %90 = vmatpush1.msra.mxu0 %v28
  %91 = vmatprep.subr.mxu0 %v33
  %92 = vmatpush1.msra.mxu0 %v32
  %93 = vmatprep.subr.mxu0 %v37
  %94 = vmatpush1.msra.mxu0 %v36
  %95 = vmatprep.subr.mxu0 %v41
  %96 = vmatpush1.msra.mxu0 %v40
  %97 = vmatprep.subr.mxu0 %v45
  %98 = vmatpush1.msra.mxu0 %v44
  %99 = vmatprep.subr.mxu0 %v49
  %100 = vmatpush1.msra.mxu0 %v48
  %101 = vmatprep.subr.mxu0 %v53
  %102 = vmatpush1.msra.mxu0 %v52
  %103 = vmatprep.subr.mxu0 %v57
  %104 = vmatpush1.msra.mxu0 %v56
  %105 = vmatprep.subr.mxu0 0.0
  %106 = vmatpush1.msra.mxu0 0.0
  %107 = vmatprep.subr.mxu0 0.0
  %108 = vmatpush1.msra.mxu0 0.0
  %109 = vmatprep.subr.mxu0 0.0
  %110 = vmatpush1.msra.mxu0 0.0
  %111 = vmatprep.subr.mxu0 0.0
  %112 = vmatpush1.msra.mxu0 0.0
  %113 = vmatprep.subr.mxu0 0.0
  %114 = vmatpush1.msra.mxu0 0.0
  %115 = vmatprep.subr.mxu0 0.0
  %116 = vmatpush1.msra.mxu0 0.0
  %117 = vmatprep.subr.mxu0 0.0
  %118 = vmatpush1.msra.mxu0 0.0
  %119 = vmatprep.subr.mxu0 0.0
  %120 = vmatpush1.msra.mxu0 0.0
  %121 = vmatprep.subr.mxu0 0.0
  %122 = vmatpush1.msra.mxu0 0.0
  %123 = vmatprep.subr.mxu0 0.0
  %124 = vmatpush1.msra.mxu0 0.0
  %125 = vmatprep.subr.mxu0 0.0
  %126 = vmatpush1.msra.mxu0 0.0
  %127 = vmatprep.subr.mxu0 0.0
  %128 = vmatpush1.msra.mxu0 0.0
  %129 = vmatprep.subr.mxu0 0.0
  %130 = vmatpush1.msra.mxu0 0.0
  %131 = vmatprep.subr.mxu0 0.0
  %132 = vmatpush1.msra.mxu0 0.0
  %133 = vmatprep.subr.mxu0 0.0
  %134 = vmatpush1.msra.mxu0 0.0
  %135 = vmatprep.subr.mxu0 0.0
  %136 = vmatpush1.msra.mxu0 0.0
  %137 = vmatprep.subr.mxu0 0.0
  %138 = vmatpush1.msra.mxu0 0.0
  %139 = vmatprep.subr.mxu0 0.0
  %140 = vmatpush1.msra.mxu0 0.0
  %141 = vmatprep.subr.mxu0 0.0
  %142 = vmatpush1.msra.mxu0 0.0
  %143 = vmatprep.subr.mxu0 0.0
  %144 = vmatpush1.msra.mxu0 0.0
  %145 = vmatprep.subr.mxu0 0.0
  %146 = vmatpush1.msra.mxu0 0.0
  %147 = vmatprep.subr.mxu0 0.0
  %148 = vmatpush1.msra.mxu0 0.0
  %149 = vmatprep.subr.mxu0 0.0
  %150 = vmatpush1.msra.mxu0 0.0
  %151 = vmatprep.subr.mxu0 0.0
  %152 = vmatpush1.msra.mxu0 0.0
  %153 = vmatprep.mubr.f32.mxu0 0.0
  %154 = vmatmul.mubr.f32.gmra.mrb[0].mxu0 %v84
  %v155 = vpop.f32.mrb[0].mxu0
  %v156 = vadd.f32 %v65, %v155
  %v157 = vpop.f32.mrb[0].mxu0
  %v158 = vadd.f32 %v69, %v157
  %159 = vmatprep.mubr.f32.mxu0 0.0
  %160 = vmatmul.mubr.f32.gmra.mrb[0].mxu0 %v87
  %v161 = vpop.f32.mrb[0].mxu0
  %v162 = vadd.f32 %v65, %v161
  %v163 = vpop.f32.mrb[0].mxu0
  %v164 = vadd.f32 %v69, %v163
  %165 = vdwg.mxu0
  %166 = vmatprep.subr.mxu0 %v31
  %167 = vmatpush1.msra.mxu0 %v30
  %168 = vmatprep.subr.mxu0 %v35
  %169 = vmatpush1.msra.mxu0 %v34
  %170 = vmatprep.subr.mxu0 %v39
  %171 = vmatpush1.msra.mxu0 %v38
  %172 = vmatprep.subr.mxu0 %v43
  %173 = vmatpush1.msra.mxu0 %v42
  %174 = vmatprep.subr.mxu0 %v47
  %175 = vmatpush1.msra.mxu0 %v46
  %176 = vmatprep.subr.mxu0 %v51
  %177 = vmatpush1.msra.mxu0 %v50
  %178 = vmatprep.subr.mxu0 %v55
  %179 = vmatpush1.msra.mxu0 %v54
  %180 = vmatprep.subr.mxu0 %v59
  %181 = vmatpush1.msra.mxu0 %v58
  %182 = vmatprep.subr.mxu0 0.0
  %183 = vmatpush1.msra.mxu0 0.0
  %184 = vmatprep.subr.mxu0 0.0
  %185 = vmatpush1.msra.mxu0 0.0
  %186 = vmatprep.subr.mxu0 0.0
  %187 = vmatpush1.msra.mxu0 0.0
  %188 = vmatprep.subr.mxu0 0.0
  %189 = vmatpush1.msra.mxu0 0.0
  %190 = vmatprep.subr.mxu0 0.0
  %191 = vmatpush1.msra.mxu0 0.0
  %192 = vmatprep.subr.mxu0 0.0
  %193 = vmatpush1.msra.mxu0 0.0
  %194 = vmatprep.subr.mxu0 0.0
  %195 = vmatpush1.msra.mxu0 0.0
  %196 = vmatprep.subr.mxu0 0.0
  %197 = vmatpush1.msra.mxu0 0.0
  %198 = vmatprep.subr.mxu0 0.0
  %199 = vmatpush1.msra.mxu0 0.0
  %200 = vmatprep.subr.mxu0 0.0
  %201 = vmatpush1.msra.mxu0 0.0
  %202 = vmatprep.subr.mxu0 0.0
  %203 = vmatpush1.msra.mxu0 0.0
  %204 = vmatprep.subr.mxu0 0.0
  %205 = vmatpush1.msra.mxu0 0.0
  %206 = vmatprep.subr.mxu0 0.0
  %207 = vmatpush1.msra.mxu0 0.0
  %208 = vmatprep.subr.mxu0 0.0
  %209 = vmatpush1.msra.mxu0 0.0
  %210 = vmatprep.subr.mxu0 0.0
  %211 = vmatpush1.msra.mxu0 0.0
  %212 = vmatprep.subr.mxu0 0.0
  %213 = vmatpush1.msra.mxu0 0.0
  %214 = vmatprep.subr.mxu0 0.0
  %215 = vmatpush1.msra.mxu0 0.0
  %216 = vmatprep.subr.mxu0 0.0
  %217 = vmatpush1.msra.mxu0 0.0
  %218 = vmatprep.subr.mxu0 0.0
  %219 = vmatpush1.msra.mxu0 0.0
  %220 = vmatprep.subr.mxu0 0.0
  %221 = vmatpush1.msra.mxu0 0.0
  %222 = vmatprep.subr.mxu0 0.0
  %223 = vmatpush1.msra.mxu0 0.0
  %224 = vmatprep.subr.mxu0 0.0
  %225 = vmatpush1.msra.mxu0 0.0
  %226 = vmatprep.subr.mxu0 0.0
  %227 = vmatpush1.msra.mxu0 0.0
  %228 = vmatprep.subr.mxu0 0.0
  %229 = vmatpush1.msra.mxu0 0.0
  %230 = vmatprep.mubr.f32.mxu0 0.0
  %231 = vmatmul.mubr.f32.gmra.mrb[0].mxu0 %v84
  %v232 = vpop.f32.mrb[0].mxu0
  %v233 = vadd.f32 %v73, %v232
  %v234 = vpop.f32.mrb[0].mxu0
  %v235 = vadd.f32 %v77, %v234
  %236 = vmatprep.mubr.f32.mxu0 0.0
  %237 = vmatmul.mubr.f32.gmra.mrb[0].mxu0 %v87
  %v238 = vpop.f32.mrb[0].mxu0
  %v239 = vadd.f32 %v73, %v238
  %v240 = vpop.f32.mrb[0].mxu0
  %v241 = vadd.f32 %v77, %v240
  %242 = vdwg.mxu0
  %v243 = vld [vmem:[%s2] sm:$0xff]
  %v244 = vld [vmem:[%s2 + $0x8] sm:$0xff]
  %v245 = vld [vmem:[%s2 + $0x10] sm:$0xff]
  %v246 = vld [vmem:[%s2 + $0x18] sm:$0xff]
  %v247 = vld [vmem:[%s2 + $0x20] sm:$0xff]
  %v248 = vld [vmem:[%s2 + $0x28] sm:$0xff]
  %v249 = vld [vmem:[%s2 + $0x30] sm:$0xff]
  %v250 = vld [vmem:[%s2 + $0x38] sm:$0xff]
  %v251 = vld [vmem:[%s2 + $0x40] sm:$0xff]
  %v252 = vld [vmem:[%s2 + $0x48] sm:$0xff]
  %v253 = vld [vmem:[%s2 + $0x50] sm:$0xff]
  %v254 = vld [vmem:[%s2 + $0x58] sm:$0xff]
  %v255 = vld [vmem:[%s2 + $0x60] sm:$0xff]
  %v256 = vld [vmem:[%s2 + $0x68] sm:$0xff]
  %v257 = vld [vmem:[%s2 + $0x70] sm:$0xff]
  %v258 = vld [vmem:[%s2 + $0x78] sm:$0xff]
  %v259 = vld [vmem:[%s2 + $0x80] sm:$0xff]
  %v260 = vld [vmem:[%s2 + $0x88] sm:$0xff]
  %v261 = vld [vmem:[%s2 + $0x90] sm:$0xff]
  %v262 = vld [vmem:[%s2 + $0x98] sm:$0xff]
  %v263 = vld [vmem:[%s2 + $0xa0] sm:$0xff]
  %v264 = vld [vmem:[%s2 + $0xa8] sm:$0xff]
  %v265 = vld [vmem:[%s2 + $0xb0] sm:$0xff]
  %v266 = vld [vmem:[%s2 + $0xb8] sm:$0xff]
  %v267 = vld [vmem:[%s2 + $0xc0] sm:$0xff]
  %v268 = vld [vmem:[%s2 + $0xc8] sm:$0xff]
  %v269 = vld [vmem:[%s2 + $0xd0] sm:$0xff]
  %v270 = vld [vmem:[%s2 + $0xd8] sm:$0xff]
  %v271 = vld [vmem:[%s2 + $0xe0] sm:$0xff]
  %v272 = vld [vmem:[%s2 + $0xe8] sm:$0xff]
  %v273 = vld [vmem:[%s2 + $0xf0] sm:$0xff]
  %v274 = vld [vmem:[%s2 + $0xf8] sm:$0xff]
  %v275 = vld [vmem:[%s2 + $0x100] sm:$0xff]
  %v276 = vld [vmem:[%s2 + $0x108] sm:$0xff]
  %v277 = vld [vmem:[%s2 + $0x110] sm:$0xff]
  %v278 = vld [vmem:[%s2 + $0x118] sm:$0xff]
  %v279 = vld [vmem:[%s2 + $0x120] sm:$0xff]
  %v280 = vld [vmem:[%s2 + $0x128] sm:$0xff]
  %v281 = vld [vmem:[%s2 + $0x130] sm:$0xff]
  %v282 = vld [vmem:[%s2 + $0x138] sm:$0xff]
  %v283 = vld [vmem:[%s2 + $0x140] sm:$0xff]
  %v284 = vld [vmem:[%s2 + $0x148] sm:$0xff]
  %v285 = vld [vmem:[%s2 + $0x150] sm:$0xff]
  %v286 = vld [vmem:[%s2 + $0x158] sm:$0xff]
  %v287 = vld [vmem:[%s2 + $0x160] sm:$0xff]
  %v288 = vld [vmem:[%s2 + $0x168] sm:$0xff]
  %v289 = vld [vmem:[%s2 + $0x170] sm:$0xff]
  %v290 = vld [vmem:[%s2 + $0x178] sm:$0xff]
  %v291 = vld [vmem:[%s2 + $0x180] sm:$0xff]
  %v292 = vld [vmem:[%s2 + $0x188] sm:$0xff]
  %v293 = vld [vmem:[%s2 + $0x190] sm:$0xff]
  %v294 = vld [vmem:[%s2 + $0x198] sm:$0xff]
  %v295 = vld [vmem:[%s2 + $0x1a0] sm:$0xff]
  %v296 = vld [vmem:[%s2 + $0x1a8] sm:$0xff]
  %v297 = vld [vmem:[%s2 + $0x1b0] sm:$0xff]
  %v298 = vld [vmem:[%s2 + $0x1b8] sm:$0xff]
  %v299 = vld [vmem:[%s2 + $0x1c0] sm:$0xff]
  %v300 = vld [vmem:[%s2 + $0x1c8] sm:$0xff]
  %v301 = vld [vmem:[%s2 + $0x1d0] sm:$0xff]
  %v302 = vld [vmem:[%s2 + $0x1d8] sm:$0xff]
  %v303 = vld [vmem:[%s2 + $0x1e0] sm:$0xff]
  %v304 = vld [vmem:[%s2 + $0x1e8] sm:$0xff]
  %v305 = vld [vmem:[%s2 + $0x1f0] sm:$0xff]
  %v306 = vld [vmem:[%s2 + $0x1f8] sm:$0xff]
  %307 = vmatprep.subr.mxu0 %v244
  %308 = vmatpush1.msra.mxu0 %v243
  %309 = vmatprep.subr.mxu0 %v248
  %310 = vmatpush1.msra.mxu0 %v247
  %311 = vmatprep.subr.mxu0 %v252
  %312 = vmatpush1.msra.mxu0 %v251
  %313 = vmatprep.subr.mxu0 %v256
  %314 = vmatpush1.msra.mxu0 %v255
  %315 = vmatprep.subr.mxu0 %v260
  %316 = vmatpush1.msra.mxu0 %v259
  %317 = vmatprep.subr.mxu0 %v264
  %318 = vmatpush1.msra.mxu0 %v263
  %319 = vmatprep.subr.mxu0 %v268
  %320 = vmatpush1.msra.mxu0 %v267
  %321 = vmatprep.subr.mxu0 %v272
  %322 = vmatpush1.msra.mxu0 %v271
  %323 = vmatprep.subr.mxu0 %v276
  %324 = vmatpush1.msra.mxu0 %v275
  %325 = vmatprep.subr.mxu0 %v280
  %326 = vmatpush1.msra.mxu0 %v279
  %327 = vmatprep.subr.mxu0 %v284
  %328 = vmatpush1.msra.mxu0 %v283
  %329 = vmatprep.subr.mxu0 %v288
  %330 = vmatpush1.msra.mxu0 %v287
  %331 = vmatprep.subr.mxu0 %v292
  %332 = vmatpush1.msra.mxu0 %v291
  %333 = vmatprep.subr.mxu0 %v296
  %334 = vmatpush1.msra.mxu0 %v295
  %335 = vmatprep.subr.mxu0 %v300
  %336 = vmatpush1.msra.mxu0 %v299
  %337 = vmatprep.subr.mxu0 %v304
  %338 = vmatpush1.msra.mxu0 %v303
  %339 = vmatprep.subr.mxu0 0.0
  %340 = vmatpush1.msra.mxu0 0.0
  %341 = vmatprep.subr.mxu0 0.0
  %342 = vmatpush1.msra.mxu0 0.0
  %343 = vmatprep.subr.mxu0 0.0
  %344 = vmatpush1.msra.mxu0 0.0
  %345 = vmatprep.subr.mxu0 0.0
  %346 = vmatpush1.msra.mxu0 0.0
  %347 = vmatprep.subr.mxu0 0.0
  %348 = vmatpush1.msra.mxu0 0.0
  %349 = vmatprep.subr.mxu0 0.0
  %350 = vmatpush1.msra.mxu0 0.0
  %351 = vmatprep.subr.mxu0 0.0
  %352 = vmatpush1.msra.mxu0 0.0
  %353 = vmatprep.subr.mxu0 0.0
  %354 = vmatpush1.msra.mxu0 0.0
  %355 = vmatprep.subr.mxu0 0.0
  %356 = vmatpush1.msra.mxu0 0.0
  %357 = vmatprep.subr.mxu0 0.0
  %358 = vmatpush1.msra.mxu0 0.0
  %359 = vmatprep.subr.mxu0 0.0
  %360 = vmatpush1.msra.mxu0 0.0
  %361 = vmatprep.subr.mxu0 0.0
  %362 = vmatpush1.msra.mxu0 0.0
  %363 = vmatprep.subr.mxu0 0.0
  %364 = vmatpush1.msra.mxu0 0.0
  %365 = vmatprep.subr.mxu0 0.0
  %366 = vmatpush1.msra.mxu0 0.0
  %367 = vmatprep.subr.mxu0 0.0
  %368 = vmatpush1.msra.mxu0 0.0
  %369 = vmatprep.subr.mxu0 0.0
  %370 = vmatpush1.msra.mxu0 0.0
  %371 = vmatprep.mubr.f32.mxu0 0.0
  %372 = vmatmul.mubr.f32.gmra.mrb[0].mxu0 0.0
  %v373 = vpop.f32.mrb[0].mxu0
  %v374 = vadd.f32 0.0, %v373
  %v375 = vpop.f32.mrb[0].mxu0
  %v376 = vadd.f32 0.0, %v375
  %377 = vdwg.mxu0
  %378 = vmatprep.subr.mxu0 %v246
  %379 = vmatpush1.msra.mxu0 %v245
  %380 = vmatprep.subr.mxu0 %v250
  %381 = vmatpush1.msra.mxu0 %v249
  %382 = vmatprep.subr.mxu0 %v254
  %383 = vmatpush1.msra.mxu0 %v253
  %384 = vmatprep.subr.mxu0 %v258
  %385 = vmatpush1.msra.mxu0 %v257
  %386 = vmatprep.subr.mxu0 %v262
  %387 = vmatpush1.msra.mxu0 %v261
  %388 = vmatprep.subr.mxu0 %v266
  %389 = vmatpush1.msra.mxu0 %v265
  %390 = vmatprep.subr.mxu0 %v270
  %391 = vmatpush1.msra.mxu0 %v269
  %392 = vmatprep.subr.mxu0 %v274
  %393 = vmatpush1.msra.mxu0 %v273
  %394 = vmatprep.subr.mxu0 %v278
  %395 = vmatpush1.msra.mxu0 %v277
  %396 = vmatprep.subr.mxu0 %v282
  %397 = vmatpush1.msra.mxu0 %v281
  %398 = vmatprep.subr.mxu0 %v286
  %399 = vmatpush1.msra.mxu0 %v285
  %400 = vmatprep.subr.mxu0 %v290
  %401 = vmatpush1.msra.mxu0 %v289
  %402 = vmatprep.subr.mxu0 %v294
  %403 = vmatpush1.msra.mxu0 %v293
  %404 = vmatprep.subr.mxu0 %v298
  %405 = vmatpush1.msra.mxu0 %v297
  %406 = vmatprep.subr.mxu0 %v302
  %407 = vmatpush1.msra.mxu0 %v301
  %408 = vmatprep.subr.mxu0 %v306
  %409 = vmatpush1.msra.mxu0 %v305
  %410 = vmatprep.subr.mxu0 0.0
  %411 = vmatpush1.msra.mxu0 0.0
  %412 = vmatprep.subr.mxu0 0.0
  %413 = vmatpush1.msra.mxu0 0.0
  %414 = vmatprep.subr.mxu0 0.0
  %415 = vmatpush1.msra.mxu0 0.0
  %416 = vmatprep.subr.mxu0 0.0
  %417 = vmatpush1.msra.mxu0 0.0
  %418 = vmatprep.subr.mxu0 0.0
  %419 = vmatpush1.msra.mxu0 0.0
  %420 = vmatprep.subr.mxu0 0.0
  %421 = vmatpush1.msra.mxu0 0.0
  %422 = vmatprep.subr.mxu0 0.0
  %423 = vmatpush1.msra.mxu0 0.0
  %424 = vmatprep.subr.mxu0 0.0
  %425 = vmatpush1.msra.mxu0 0.0
  %426 = vmatprep.subr.mxu0 0.0
  %427 = vmatpush1.msra.mxu0 0.0
  %428 = vmatprep.subr.mxu0 0.0
  %429 = vmatpush1.msra.mxu0 0.0
  %430 = vmatprep.subr.mxu0 0.0
  %431 = vmatpush1.msra.mxu0 0.0
  %432 = vmatprep.subr.mxu0 0.0
  %433 = vmatpush1.msra.mxu0 0.0
  %434 = vmatprep.subr.mxu0 0.0
  %435 = vmatpush1.msra.mxu0 0.0
  %436 = vmatprep.subr.mxu0 0.0
  %437 = vmatpush1.msra.mxu0 0.0
  %438 = vmatprep.subr.mxu0 0.0
  %439 = vmatpush1.msra.mxu0 0.0
  %440 = vmatprep.subr.mxu0 0.0
  %441 = vmatpush1.msra.mxu0 0.0
  %442 = vmatprep.mubr.f32.mxu0 0.0
  %443 = vmatmul.mubr.f32.gmra.mrb[0].mxu0 0.0
  %v444 = vpop.f32.mrb[0].mxu0
  %v445 = vadd.f32 0.0, %v444
  %v446 = vpop.f32.mrb[0].mxu0
  %v447 = vadd.f32 0.0, %v446
  %448 = vdwg.mxu0
  %v449 = vadd.f32 %v156, %v374
  %v450 = vadd.f32 %v158, %v376
  %v451 = vadd.f32 %v233, %v445
  %v452 = vadd.f32 %v235, %v447
  %v453 = vxor.u32 %v449, 2147483648
  %v454 = vmul.f32 %v453, 1.442695
  %v455 = vpow.pop %v454
  %v456 = vadd.f32 %v455, 1.0
  %v457 = vrcp.pop %v456
  %v458 = vmul.f32 1.0, %v457
  %v459 = vxor.u32 %v450, 2147483648
  %v460 = vmul.f32 %v459, 1.442695
  %v461 = vpow.pop %v460
  %v462 = vadd.f32 %v461, 1.0
  %v463 = vrcp.pop %v462
  %v464 = vmul.f32 1.0, %v463
  %v465 = vtanh.pop %v451
  %v466 = vxor.u32 %v452, 2147483648
  %v467 = vmul.f32 %v466, 1.442695
  %v468 = vpow.pop %v467
  %v469 = vadd.f32 %v468, 1.0
  %v470 = vrcp.pop %v469
  %v471 = vmul.f32 1.0, %v470
  %v472 = vmul.f32 %v464, 0.0
  %v473 = vmul.f32 %v458, %v465
  %v474 = vadd.f32 %v472, %v473
  %v475 = vtanh.pop %v474
  %v476 = vmul.f32 %v471, %v475
  %477 = vst [vmem:[#allocation2] sm:$0x3] %v476
  %478 = vmatprep.subr.mxu0 %v244
  %479 = vmatpush1.msra.mxu0 %v243
  %480 = vmatprep.subr.mxu0 %v248
  %481 = vmatpush1.msra.mxu0 %v247
  %482 = vmatprep.subr.mxu0 %v252
  %483 = vmatpush1.msra.mxu0 %v251
  %484 = vmatprep.subr.mxu0 %v256
  %485 = vmatpush1.msra.mxu0 %v255
  %486 = vmatprep.subr.mxu0 %v260
  %487 = vmatpush1.msra.mxu0 %v259
  %488 = vmatprep.subr.mxu0 %v264
  %489 = vmatpush1.msra.mxu0 %v263
  %490 = vmatprep.subr.mxu0 %v268
  %491 = vmatpush1.msra.mxu0 %v267
  %492 = vmatprep.subr.mxu0 %v272
  %493 = vmatpush1.msra.mxu0 %v271
  %494 = vmatprep.subr.mxu0 %v276
  %495 = vmatpush1.msra.mxu0 %v275
  %496 = vmatprep.subr.mxu0 %v280
  %497 = vmatpush1.msra.mxu0 %v279
  %498 = vmatprep.subr.mxu0 %v284
  %499 = vmatpush1.msra.mxu0 %v283
  %500 = vmatprep.subr.mxu0 %v288
  %501 = vmatpush1.msra.mxu0 %v287
  %502 = vmatprep.subr.mxu0 %v292
  %503 = vmatpush1.msra.mxu0 %v291
  %504 = vmatprep.subr.mxu0 %v296
  %505 = vmatpush1.msra.mxu0 %v295
  %506 = vmatprep.subr.mxu0 %v300
  %507 = vmatpush1.msra.mxu0 %v299
  %508 = vmatprep.subr.mxu0 %v304
  %509 = vmatpush1.msra.mxu0 %v303
  %510 = vmatprep.subr.mxu0 0.0
  %511 = vmatpush1.msra.mxu0 0.0
  %512 = vmatprep.subr.mxu0 0.0
  %513 = vmatpush1.msra.mxu0 0.0
  %514 = vmatprep.subr.mxu0 0.0
  %515 = vmatpush1.msra.mxu0 0.0
  %516 = vmatprep.subr.mxu0 0.0
  %517 = vmatpush1.msra.mxu0 0.0
  %518 = vmatprep.subr.mxu0 0.0
  %519 = vmatpush1.msra.mxu0 0.0
  %520 = vmatprep.subr.mxu0 0.0
  %521 = vmatpush1.msra.mxu0 0.0
  %522 = vmatprep.subr.mxu0 0.0
  %523 = vmatpush1.msra.mxu0 0.0
  %524 = vmatprep.subr.mxu0 0.0
  %525 = vmatpush1.msra.mxu0 0.0
  %526 = vmatprep.subr.mxu0 0.0
  %527 = vmatpush1.msra.mxu0 0.0
  %528 = vmatprep.subr.mxu0 0.0
  %529 = vmatpush1.msra.mxu0 0.0
  %530 = vmatprep.subr.mxu0 0.0
  %531 = vmatpush1.msra.mxu0 0.0
  %532 = vmatprep.subr.mxu0 0.0
  %533 = vmatpush1.msra.mxu0 0.0
  %534 = vmatprep.subr.mxu0 0.0
  %535 = vmatpush1.msra.mxu0 0.0
  %536 = vmatprep.subr.mxu0 0.0
  %537 = vmatpush1.msra.mxu0 0.0
  %538 = vmatprep.subr.mxu0 0.0
  %539 = vmatpush1.msra.mxu0 0.0
  %540 = vmatprep.subr.mxu0 0.0
  %541 = vmatpush1.msra.mxu0 0.0
  %542 = vmatprep.mubr.f32.mxu0 0.0
  %543 = vmatmul.mubr.f32.gmra.mrb[0].mxu0 %v476
  %v544 = vpop.f32.mrb[0].mxu0
  %v545 = vadd.f32 0.0, %v544
  %v546 = vpop.f32.mrb[0].mxu0
  %v547 = vadd.f32 0.0, %v546
  %548 = vdwg.mxu0
  %549 = vmatprep.subr.mxu0 %v246
  %550 = vmatpush1.msra.mxu0 %v245
  %551 = vmatprep.subr.mxu0 %v250
  %552 = vmatpush1.msra.mxu0 %v249
  %553 = vmatprep.subr.mxu0 %v254
  %554 = vmatpush1.msra.mxu0 %v253
  %555 = vmatprep.subr.mxu0 %v258
  %556 = vmatpush1.msra.mxu0 %v257
  %557 = vmatprep.subr.mxu0 %v262
  %558 = vmatpush1.msra.mxu0 %v261
  %559 = vmatprep.subr.mxu0 %v266
  %560 = vmatpush1.msra.mxu0 %v265
  %561 = vmatprep.subr.mxu0 %v270
  %562 = vmatpush1.msra.mxu0 %v269
  %563 = vmatprep.subr.mxu0 %v274
  %564 = vmatpush1.msra.mxu0 %v273
  %565 = vmatprep.subr.mxu0 %v278
  %566 = vmatpush1.msra.mxu0 %v277
  %567 = vmatprep.subr.mxu0 %v282
  %568 = vmatpush1.msra.mxu0 %v281
  %569 = vmatprep.subr.mxu0 %v286
  %570 = vmatpush1.msra.mxu0 %v285
  %571 = vmatprep.subr.mxu0 %v290
  %572 = vmatpush1.msra.mxu0 %v289
  %573 = vmatprep.subr.mxu0 %v294
  %574 = vmatpush1.msra.mxu0 %v293
  %575 = vmatprep.subr.mxu0 %v298
  %576 = vmatpush1.msra.mxu0 %v297
  %577 = vmatprep.subr.mxu0 %v302
  %578 = vmatpush1.msra.mxu0 %v301
  %579 = vmatprep.subr.mxu0 %v306
  %580 = vmatpush1.msra.mxu0 %v305
  %581 = vmatprep.subr.mxu0 0.0
  %582 = vmatpush1.msra.mxu0 0.0
  %583 = vmatprep.subr.mxu0 0.0
  %584 = vmatpush1.msra.mxu0 0.0
  %585 = vmatprep.subr.mxu0 0.0
  %586 = vmatpush1.msra.mxu0 0.0
  %587 = vmatprep.subr.mxu0 0.0
  %588 = vmatpush1.msra.mxu0 0.0
  %589 = vmatprep.subr.mxu0 0.0
  %590 = vmatpush1.msra.mxu0 0.0
  %591 = vmatprep.subr.mxu0 0.0
  %592 = vmatpush1.msra.mxu0 0.0
  %593 = vmatprep.subr.mxu0 0.0
  %594 = vmatpush1.msra.mxu0 0.0
  %595 = vmatprep.subr.mxu0 0.0
  %596 = vmatpush1.msra.mxu0 0.0
  %597 = vmatprep.subr.mxu0 0.0
  %598 = vmatpush1.msra.mxu0 0.0
  %599 = vmatprep.subr.mxu0 0.0
  %600 = vmatpush1.msra.mxu0 0.0
  %601 = vmatprep.subr.mxu0 0.0
  %602 = vmatpush1.msra.mxu0 0.0
  %603 = vmatprep.subr.mxu0 0.0
  %604 = vmatpush1.msra.mxu0 0.0
  %605 = vmatprep.subr.mxu0 0.0
  %606 = vmatpush1.msra.mxu0 0.0
  %607 = vmatprep.subr.mxu0 0.0
  %608 = vmatpush1.msra.mxu0 0.0
  %609 = vmatprep.subr.mxu0 0.0
  %610 = vmatpush1.msra.mxu0 0.0
  %611 = vmatprep.subr.mxu0 0.0
  %612 = vmatpush1.msra.mxu0 0.0
  %613 = vmatprep.mubr.f32.mxu0 0.0
  %614 = vmatmul.mubr.f32.gmra.mrb[0].mxu0 %v476
  %v615 = vpop.f32.mrb[0].mxu0
  %v616 = vadd.f32 0.0, %v615
  %v617 = vpop.f32.mrb[0].mxu0
  %v618 = vadd.f32 0.0, %v617
  %619 = vdwg.mxu0
  %v624 = vrot.slane %v545, 6
  %v625 = vrot.slane %v547, 6
  %v626 = vrot.slane %v616, 6
  %v627 = vrot.slane %v618, 6
  %v632 = vadd.f32 %v156, %v624
  %v633 = vadd.f32 %v158, %v625
  %v634 = vadd.f32 %v233, %v626
  %v635 = vadd.f32 %v235, %v627
  %v636 = vxor.u32 %v632, 2147483648
  %v637 = vmul.f32 %v636, 1.442695
  %v638 = vpow.pop %v637
  %v639 = vadd.f32 %v638, 1.0
  %v640 = vrcp.pop %v639
  %v641 = vmul.f32 1.0, %v640
  %v642 = vxor.u32 %v633, 2147483648
  %v643 = vmul.f32 %v642, 1.442695
  %v644 = vpow.pop %v643
  %v645 = vadd.f32 %v644, 1.0
  %v646 = vrcp.pop %v645
  %v647 = vmul.f32 1.0, %v646
  %v648 = vtanh.pop %v634
  %v649 = vxor.u32 %v635, 2147483648
  %v650 = vmul.f32 %v649, 1.442695
  %v651 = vpow.pop %v650
  %v652 = vadd.f32 %v651, 1.0
  %v653 = vrcp.pop %v652
  %v654 = vmul.f32 1.0, %v653
  %v656 = vrot.slane %v474, 6
  %v658 = vmul.f32 %v647, %v656
  %v659 = vmul.f32 %v641, %v648
  %v660 = vadd.f32 %v658, %v659
  %v661 = vtanh.pop %v660
  %v662 = vmul.f32 %v654, %v661
  %663 = vst [vmem:[#allocation2] sm:$0xc] %v662
  %v665 = vrot.slane %v662, 2
  %667 = vmatprep.subr.mxu0 %v244
  %668 = vmatpush1.msra.mxu0 %v243
  %669 = vmatprep.subr.mxu0 %v248
  %670 = vmatpush1.msra.mxu0 %v247
  %671 = vmatprep.subr.mxu0 %v252
  %672 = vmatpush1.msra.mxu0 %v251
  %673 = vmatprep.subr.mxu0 %v256
  %674 = vmatpush1.msra.mxu0 %v255
  %675 = vmatprep.subr.mxu0 %v260
  %676 = vmatpush1.msra.mxu0 %v259
  %677 = vmatprep.subr.mxu0 %v264
  %678 = vmatpush1.msra.mxu0 %v263
  %679 = vmatprep.subr.mxu0 %v268
  %680 = vmatpush1.msra.mxu0 %v267
  %681 = vmatprep.subr.mxu0 %v272
  %682 = vmatpush1.msra.mxu0 %v271
  %683 = vmatprep.subr.mxu0 %v276
  %684 = vmatpush1.msra.mxu0 %v275
  %685 = vmatprep.subr.mxu0 %v280
  %686 = vmatpush1.msra.mxu0 %v279
  %687 = vmatprep.subr.mxu0 %v284
  %688 = vmatpush1.msra.mxu0 %v283
  %689 = vmatprep.subr.mxu0 %v288
  %690 = vmatpush1.msra.mxu0 %v287
  %691 = vmatprep.subr.mxu0 %v292
  %692 = vmatpush1.msra.mxu0 %v291
  %693 = vmatprep.subr.mxu0 %v296
  %694 = vmatpush1.msra.mxu0 %v295
  %695 = vmatprep.subr.mxu0 %v300
  %696 = vmatpush1.msra.mxu0 %v299
  %697 = vmatprep.subr.mxu0 %v304
  %698 = vmatpush1.msra.mxu0 %v303
  %699 = vmatprep.subr.mxu0 0.0
  %700 = vmatpush1.msra.mxu0 0.0
  %701 = vmatprep.subr.mxu0 0.0
  %702 = vmatpush1.msra.mxu0 0.0
  %703 = vmatprep.subr.mxu0 0.0
  %704 = vmatpush1.msra.mxu0 0.0
  %705 = vmatprep.subr.mxu0 0.0
  %706 = vmatpush1.msra.mxu0 0.0
  %707 = vmatprep.subr.mxu0 0.0
  %708 = vmatpush1.msra.mxu0 0.0
  %709 = vmatprep.subr.mxu0 0.0
  %710 = vmatpush1.msra.mxu0 0.0
  %711 = vmatprep.subr.mxu0 0.0
  %712 = vmatpush1.msra.mxu0 0.0
  %713 = vmatprep.subr.mxu0 0.0
  %714 = vmatpush1.msra.mxu0 0.0
  %715 = vmatprep.subr.mxu0 0.0
  %716 = vmatpush1.msra.mxu0 0.0
  %717 = vmatprep.subr.mxu0 0.0
  %718 = vmatpush1.msra.mxu0 0.0
  %719 = vmatprep.subr.mxu0 0.0
  %720 = vmatpush1.msra.mxu0 0.0
  %721 = vmatprep.subr.mxu0 0.0
  %722 = vmatpush1.msra.mxu0 0.0
  %723 = vmatprep.subr.mxu0 0.0
  %724 = vmatpush1.msra.mxu0 0.0
  %725 = vmatprep.subr.mxu0 0.0
  %726 = vmatpush1.msra.mxu0 0.0
  %727 = vmatprep.subr.mxu0 0.0
  %728 = vmatpush1.msra.mxu0 0.0
  %729 = vmatprep.subr.mxu0 0.0
  %730 = vmatpush1.msra.mxu0 0.0
  %731 = vmatprep.mubr.f32.mxu0 0.0
  %732 = vmatmul.mubr.f32.gmra.mrb[0].mxu0 %v665
  %v733 = vpop.f32.mrb[0].mxu0
  %v734 = vadd.f32 0.0, %v733
  %v735 = vpop.f32.mrb[0].mxu0
  %v736 = vadd.f32 0.0, %v735
  %737 = vdwg.mxu0
  %738 = vmatprep.subr.mxu0 %v246
  %739 = vmatpush1.msra.mxu0 %v245
  %740 = vmatprep.subr.mxu0 %v250
  %741 = vmatpush1.msra.mxu0 %v249
  %742 = vmatprep.subr.mxu0 %v254
  %743 = vmatpush1.msra.mxu0 %v253
  %744 = vmatprep.subr.mxu0 %v258
  %745 = vmatpush1.msra.mxu0 %v257
  %746 = vmatprep.subr.mxu0 %v262
  %747 = vmatpush1.msra.mxu0 %v261
  %748 = vmatprep.subr.mxu0 %v266
  %749 = vmatpush1.msra.mxu0 %v265
  %750 = vmatprep.subr.mxu0 %v270
  %751 = vmatpush1.msra.mxu0 %v269
  %752 = vmatprep.subr.mxu0 %v274
  %753 = vmatpush1.msra.mxu0 %v273
  %754 = vmatprep.subr.mxu0 %v278
  %755 = vmatpush1.msra.mxu0 %v277
  %756 = vmatprep.subr.mxu0 %v282
  %757 = vmatpush1.msra.mxu0 %v281
  %758 = vmatprep.subr.mxu0 %v286
  %759 = vmatpush1.msra.mxu0 %v285
  %760 = vmatprep.subr.mxu0 %v290
  %761 = vmatpush1.msra.mxu0 %v289
  %762 = vmatprep.subr.mxu0 %v294
  %763 = vmatpush1.msra.mxu0 %v293
  %764 = vmatprep.subr.mxu0 %v298
  %765 = vmatpush1.msra.mxu0 %v297
  %766 = vmatprep.subr.mxu0 %v302
  %767 = vmatpush1.msra.mxu0 %v301
  %768 = vmatprep.subr.mxu0 %v306
  %769 = vmatpush1.msra.mxu0 %v305
  %770 = vmatprep.subr.mxu0 0.0
  %771 = vmatpush1.msra.mxu0 0.0
  %772 = vmatprep.subr.mxu0 0.0
  %773 = vmatpush1.msra.mxu0 0.0
  %774 = vmatprep.subr.mxu0 0.0
  %775 = vmatpush1.msra.mxu0 0.0
  %776 = vmatprep.subr.mxu0 0.0
  %777 = vmatpush1.msra.mxu0 0.0
  %778 = vmatprep.subr.mxu0 0.0
  %779 = vmatpush1.msra.mxu0 0.0
  %780 = vmatprep.subr.mxu0 0.0
  %781 = vmatpush1.msra.mxu0 0.0
  %782 = vmatprep.subr.mxu0 0.0
  %783 = vmatpush1.msra.mxu0 0.0
  %784 = vmatprep.subr.mxu0 0.0
  %785 = vmatpush1.msra.mxu0 0.0
  %786 = vmatprep.subr.mxu0 0.0
  %787 = vmatpush1.msra.mxu0 0.0
  %788 = vmatprep.subr.mxu0 0.0
  %789 = vmatpush1.msra.mxu0 0.0
  %790 = vmatprep.subr.mxu0 0.0
  %791 = vmatpush1.msra.mxu0 0.0
  %792 = vmatprep.subr.mxu0 0.0
  %793 = vmatpush1.msra.mxu0 0.0
  %794 = vmatprep.subr.mxu0 0.0
  %795 = vmatpush1.msra.mxu0 0.0
  %796 = vmatprep.subr.mxu0 0.0
  %797 = vmatpush1.msra.mxu0 0.0
  %798 = vmatprep.subr.mxu0 0.0
  %799 = vmatpush1.msra.mxu0 0.0
  %800 = vmatprep.subr.mxu0 0.0
  %801 = vmatpush1.msra.mxu0 0.0
  %802 = vmatprep.mubr.f32.mxu0 0.0
  %803 = vmatmul.mubr.f32.gmra.mrb[0].mxu0 %v665
  %v804 = vpop.f32.mrb[0].mxu0
  %v805 = vadd.f32 0.0, %v804
  %v806 = vpop.f32.mrb[0].mxu0
  %v807 = vadd.f32 0.0, %v806
  %808 = vdwg.mxu0
  %v813 = vrot.slane %v734, 4
  %v814 = vrot.slane %v736, 4
  %v815 = vrot.slane %v805, 4
  %v816 = vrot.slane %v807, 4
  %v821 = vadd.f32 %v156, %v813
  %v822 = vadd.f32 %v158, %v814
  %v823 = vadd.f32 %v233, %v815
  %v824 = vadd.f32 %v235, %v816
  %v825 = vxor.u32 %v821, 2147483648
  %v826 = vmul.f32 %v825, 1.442695
  %v827 = vpow.pop %v826
  %v828 = vadd.f32 %v827, 1.0
  %v829 = vrcp.pop %v828
  %v830 = vmul.f32 1.0, %v829
  %v831 = vxor.u32 %v822, 2147483648
  %v832 = vmul.f32 %v831, 1.442695
  %v833 = vpow.pop %v832
  %v834 = vadd.f32 %v833, 1.0
  %v835 = vrcp.pop %v834
  %v836 = vmul.f32 1.0, %v835
  %v837 = vtanh.pop %v823
  %v838 = vxor.u32 %v824, 2147483648
  %v839 = vmul.f32 %v838, 1.442695
  %v840 = vpow.pop %v839
  %v841 = vadd.f32 %v840, 1.0
  %v842 = vrcp.pop %v841
  %v843 = vmul.f32 1.0, %v842
  %v845 = vrot.slane %v660, 6
  %v847 = vmul.f32 %v836, %v845
  %v848 = vmul.f32 %v830, %v837
  %v849 = vadd.f32 %v847, %v848
  %v850 = vtanh.pop %v849
  %v851 = vmul.f32 %v843, %v850
  %852 = vst [vmem:[#allocation2] sm:$0x30] %v851
  %v854 = vrot.slane %v851, 4
  %856 = vmatprep.subr.mxu0 %v244
  %857 = vmatpush1.msra.mxu0 %v243
  %858 = vmatprep.subr.mxu0 %v248
  %859 = vmatpush1.msra.mxu0 %v247
  %860 = vmatprep.subr.mxu0 %v252
  %861 = vmatpush1.msra.mxu0 %v251
  %862 = vmatprep.subr.mxu0 %v256
  %863 = vmatpush1.msra.mxu0 %v255
  %864 = vmatprep.subr.mxu0 %v260
  %865 = vmatpush1.msra.mxu0 %v259
  %866 = vmatprep.subr.mxu0 %v264
  %867 = vmatpush1.msra.mxu0 %v263
  %868 = vmatprep.subr.mxu0 %v268
  %869 = vmatpush1.msra.mxu0 %v267
  %870 = vmatprep.subr.mxu0 %v272
  %871 = vmatpush1.msra.mxu0 %v271
  %872 = vmatprep.subr.mxu0 %v276
  %873 = vmatpush1.msra.mxu0 %v275
  %874 = vmatprep.subr.mxu0 %v280
  %875 = vmatpush1.msra.mxu0 %v279
  %876 = vmatprep.subr.mxu0 %v284
  %877 = vmatpush1.msra.mxu0 %v283
  %878 = vmatprep.subr.mxu0 %v288
  %879 = vmatpush1.msra.mxu0 %v287
  %880 = vmatprep.subr.mxu0 %v292
  %881 = vmatpush1.msra.mxu0 %v291
  %882 = vmatprep.subr.mxu0 %v296
  %883 = vmatpush1.msra.mxu0 %v295
  %884 = vmatprep.subr.mxu0 %v300
  %885 = vmatpush1.msra.mxu0 %v299
  %886 = vmatprep.subr.mxu0 %v304
  %887 = vmatpush1.msra.mxu0 %v303
  %888 = vmatprep.subr.mxu0 0.0
  %889 = vmatpush1.msra.mxu0 0.0
  %890 = vmatprep.subr.mxu0 0.0
  %891 = vmatpush1.msra.mxu0 0.0
  %892 = vmatprep.subr.mxu0 0.0
  %893 = vmatpush1.msra.mxu0 0.0
  %894 = vmatprep.subr.mxu0 0.0
  %895 = vmatpush1.msra.mxu0 0.0
  %896 = vmatprep.subr.mxu0 0.0
  %897 = vmatpush1.msra.mxu0 0.0
  %898 = vmatprep.subr.mxu0 0.0
  %899 = vmatpush1.msra.mxu0 0.0
  %900 = vmatprep.subr.mxu0 0.0
  %901 = vmatpush1.msra.mxu0 0.0
  %902 = vmatprep.subr.mxu0 0.0
  %903 = vmatpush1.msra.mxu0 0.0
  %904 = vmatprep.subr.mxu0 0.0
  %905 = vmatpush1.msra.mxu0 0.0
  %906 = vmatprep.subr.mxu0 0.0
  %907 = vmatpush1.msra.mxu0 0.0
  %908 = vmatprep.subr.mxu0 0.0
  %909 = vmatpush1.msra.mxu0 0.0
  %910 = vmatprep.subr.mxu0 0.0
  %911 = vmatpush1.msra.mxu0 0.0
  %912 = vmatprep.subr.mxu0 0.0
  %913 = vmatpush1.msra.mxu0 0.0
  %914 = vmatprep.subr.mxu0 0.0
  %915 = vmatpush1.msra.mxu0 0.0
  %916 = vmatprep.subr.mxu0 0.0
  %917 = vmatpush1.msra.mxu0 0.0
  %918 = vmatprep.subr.mxu0 0.0
  %919 = vmatpush1.msra.mxu0 0.0
  %920 = vmatprep.mubr.f32.mxu0 0.0
  %921 = vmatmul.mubr.f32.gmra.mrb[0].mxu0 %v854
  %v922 = vpop.f32.mrb[0].mxu0
  %v923 = vadd.f32 0.0, %v922
  %v924 = vpop.f32.mrb[0].mxu0
  %v925 = vadd.f32 0.0, %v924
  %926 = vdwg.mxu0
  %927 = vmatprep.subr.mxu0 %v246
  %928 = vmatpush1.msra.mxu0 %v245
  %929 = vmatprep.subr.mxu0 %v250
  %930 = vmatpush1.msra.mxu0 %v249
  %931 = vmatprep.subr.mxu0 %v254
  %932 = vmatpush1.msra.mxu0 %v253
  %933 = vmatprep.subr.mxu0 %v258
  %934 = vmatpush1.msra.mxu0 %v257
  %935 = vmatprep.subr.mxu0 %v262
  %936 = vmatpush1.msra.mxu0 %v261
  %937 = vmatprep.subr.mxu0 %v266
  %938 = vmatpush1.msra.mxu0 %v265
  %939 = vmatprep.subr.mxu0 %v270
  %940 = vmatpush1.msra.mxu0 %v269
  %941 = vmatprep.subr.mxu0 %v274
  %942 = vmatpush1.msra.mxu0 %v273
  %943 = vmatprep.subr.mxu0 %v278
  %944 = vmatpush1.msra.mxu0 %v277
  %945 = vmatprep.subr.mxu0 %v282
  %946 = vmatpush1.msra.mxu0 %v281
  %947 = vmatprep.subr.mxu0 %v286
  %948 = vmatpush1.msra.mxu0 %v285
  %949 = vmatprep.subr.mxu0 %v290
  %950 = vmatpush1.msra.mxu0 %v289
  %951 = vmatprep.subr.mxu0 %v294
  %952 = vmatpush1.msra.mxu0 %v293
  %953 = vmatprep.subr.mxu0 %v298
  %954 = vmatpush1.msra.mxu0 %v297
  %955 = vmatprep.subr.mxu0 %v302
  %956 = vmatpush1.msra.mxu0 %v301
  %957 = vmatprep.subr.mxu0 %v306
  %958 = vmatpush1.msra.mxu0 %v305
  %959 = vmatprep.subr.mxu0 0.0
  %960 = vmatpush1.msra.mxu0 0.0
  %961 = vmatprep.subr.mxu0 0.0
  %962 = vmatpush1.msra.mxu0 0.0
  %963 = vmatprep.subr.mxu0 0.0
  %964 = vmatpush1.msra.mxu0 0.0
  %965 = vmatprep.subr.mxu0 0.0
  %966 = vmatpush1.msra.mxu0 0.0
  %967 = vmatprep.subr.mxu0 0.0
  %968 = vmatpush1.msra.mxu0 0.0
  %969 = vmatprep.subr.mxu0 0.0
  %970 = vmatpush1.msra.mxu0 0.0
  %971 = vmatprep.subr.mxu0 0.0
  %972 = vmatpush1.msra.mxu0 0.0
  %973 = vmatprep.subr.mxu0 0.0
  %974 = vmatpush1.msra.mxu0 0.0
  %975 = vmatprep.subr.mxu0 0.0
  %976 = vmatpush1.msra.mxu0 0.0
  %977 = vmatprep.subr.mxu0 0.0
  %978 = vmatpush1.msra.mxu0 0.0
  %979 = vmatprep.subr.mxu0 0.0
  %980 = vmatpush1.msra.mxu0 0.0
  %981 = vmatprep.subr.mxu0 0.0
  %982 = vmatpush1.msra.mxu0 0.0
  %983 = vmatprep.subr.mxu0 0.0
  %984 = vmatpush1.msra.mxu0 0.0
  %985 = vmatprep.subr.mxu0 0.0
  %986 = vmatpush1.msra.mxu0 0.0
  %987 = vmatprep.subr.mxu0 0.0
  %988 = vmatpush1.msra.mxu0 0.0
  %989 = vmatprep.subr.mxu0 0.0
  %990 = vmatpush1.msra.mxu0 0.0
  %991 = vmatprep.mubr.f32.mxu0 0.0
  %992 = vmatmul.mubr.f32.gmra.mrb[0].mxu0 %v854
  %v993 = vpop.f32.mrb[0].mxu0
  %v994 = vadd.f32 0.0, %v993
  %v995 = vpop.f32.mrb[0].mxu0
  %v996 = vadd.f32 0.0, %v995
  %997 = vdwg.mxu0
  %v1002 = vrot.slane %v923, 2
  %v1003 = vrot.slane %v925, 2
  %v1004 = vrot.slane %v994, 2
  %v1005 = vrot.slane %v996, 2
  %v1010 = vadd.f32 %v156, %v1002
  %v1011 = vadd.f32 %v158, %v1003
  %v1012 = vadd.f32 %v233, %v1004
  %v1013 = vadd.f32 %v235, %v1005
  %v1014 = vxor.u32 %v1010, 2147483648
  %v1015 = vmul.f32 %v1014, 1.442695
  %v1016 = vpow.pop %v1015
  %v1017 = vadd.f32 %v1016, 1.0
  %v1018 = vrcp.pop %v1017
  %v1019 = vmul.f32 1.0, %v1018
  %v1020 = vxor.u32 %v1011, 2147483648
  %v1021 = vmul.f32 %v1020, 1.442695
  %v1022 = vpow.pop %v1021
  %v1023 = vadd.f32 %v1022, 1.0
  %v1024 = vrcp.pop %v1023
  %v1025 = vmul.f32 1.0, %v1024
  %v1026 = vtanh.pop %v1012
  %v1027 = vxor.u32 %v1013, 2147483648
  %v1028 = vmul.f32 %v1027, 1.442695
  %v1029 = vpow.pop %v1028
  %v1030 = vadd.f32 %v1029, 1.0
  %v1031 = vrcp.pop %v1030
  %v1032 = vmul.f32 1.0, %v1031
  %v1034 = vrot.slane %v849, 6
  %v1036 = vmul.f32 %v1025, %v1034
  %v1037 = vmul.f32 %v1019, %v1026
  %v1038 = vadd.f32 %v1036, %v1037
  %v1039 = vtanh.pop %v1038
  %v1040 = vmul.f32 %v1032, %v1039
  %1041 = vst [vmem:[#allocation2] sm:$0xc0] %v1040
  %v1043 = vrot.slane %v1040, 6
  %1045 = vmatprep.subr.mxu0 %v244
  %1046 = vmatpush1.msra.mxu0 %v243
  %1047 = vmatprep.subr.mxu0 %v248
  %1048 = vmatpush1.msra.mxu0 %v247
  %1049 = vmatprep.subr.mxu0 %v252
  %1050 = vmatpush1.msra.mxu0 %v251
  %1051 = vmatprep.subr.mxu0 %v256
  %1052 = vmatpush1.msra.mxu0 %v255
  %1053 = vmatprep.subr.mxu0 %v260
  %1054 = vmatpush1.msra.mxu0 %v259
  %1055 = vmatprep.subr.mxu0 %v264
  %1056 = vmatpush1.msra.mxu0 %v263
  %1057 = vmatprep.subr.mxu0 %v268
  %1058 = vmatpush1.msra.mxu0 %v267
  %1059 = vmatprep.subr.mxu0 %v272
  %1060 = vmatpush1.msra.mxu0 %v271
  %1061 = vmatprep.subr.mxu0 %v276
  %1062 = vmatpush1.msra.mxu0 %v275
  %1063 = vmatprep.subr.mxu0 %v280
  %1064 = vmatpush1.msra.mxu0 %v279
  %1065 = vmatprep.subr.mxu0 %v284
  %1066 = vmatpush1.msra.mxu0 %v283
  %1067 = vmatprep.subr.mxu0 %v288
  %1068 = vmatpush1.msra.mxu0 %v287
  %1069 = vmatprep.subr.mxu0 %v292
  %1070 = vmatpush1.msra.mxu0 %v291
  %1071 = vmatprep.subr.mxu0 %v296
  %1072 = vmatpush1.msra.mxu0 %v295
  %1073 = vmatprep.subr.mxu0 %v300
  %1074 = vmatpush1.msra.mxu0 %v299
  %1075 = vmatprep.subr.mxu0 %v304
  %1076 = vmatpush1.msra.mxu0 %v303
  %1077 = vmatprep.subr.mxu0 0.0
  %1078 = vmatpush1.msra.mxu0 0.0
  %1079 = vmatprep.subr.mxu0 0.0
  %1080 = vmatpush1.msra.mxu0 0.0
  %1081 = vmatprep.subr.mxu0 0.0
  %1082 = vmatpush1.msra.mxu0 0.0
  %1083 = vmatprep.subr.mxu0 0.0
  %1084 = vmatpush1.msra.mxu0 0.0
  %1085 = vmatprep.subr.mxu0 0.0
  %1086 = vmatpush1.msra.mxu0 0.0
  %1087 = vmatprep.subr.mxu0 0.0
  %1088 = vmatpush1.msra.mxu0 0.0
  %1089 = vmatprep.subr.mxu0 0.0
  %1090 = vmatpush1.msra.mxu0 0.0
  %1091 = vmatprep.subr.mxu0 0.0
  %1092 = vmatpush1.msra.mxu0 0.0
  %1093 = vmatprep.subr.mxu0 0.0
  %1094 = vmatpush1.msra.mxu0 0.0
  %1095 = vmatprep.subr.mxu0 0.0
  %1096 = vmatpush1.msra.mxu0 0.0
  %1097 = vmatprep.subr.mxu0 0.0
  %1098 = vmatpush1.msra.mxu0 0.0
  %1099 = vmatprep.subr.mxu0 0.0
  %1100 = vmatpush1.msra.mxu0 0.0
  %1101 = vmatprep.subr.mxu0 0.0
  %1102 = vmatpush1.msra.mxu0 0.0
  %1103 = vmatprep.subr.mxu0 0.0
  %1104 = vmatpush1.msra.mxu0 0.0
  %1105 = vmatprep.subr.mxu0 0.0
  %1106 = vmatpush1.msra.mxu0 0.0
  %1107 = vmatprep.subr.mxu0 0.0
  %1108 = vmatpush1.msra.mxu0 0.0
  %1109 = vmatprep.mubr.f32.mxu0 0.0
  %1110 = vmatmul.mubr.f32.gmra.mrb[0].mxu0 %v1043
  %v1111 = vpop.f32.mrb[0].mxu0
  %v1112 = vadd.f32 0.0, %v1111
  %v1113 = vpop.f32.mrb[0].mxu0
  %v1114 = vadd.f32 0.0, %v1113
  %1115 = vdwg.mxu0
  %1116 = vmatprep.subr.mxu0 %v246
  %1117 = vmatpush1.msra.mxu0 %v245
  %1118 = vmatprep.subr.mxu0 %v250
  %1119 = vmatpush1.msra.mxu0 %v249
  %1120 = vmatprep.subr.mxu0 %v254
  %1121 = vmatpush1.msra.mxu0 %v253
  %1122 = vmatprep.subr.mxu0 %v258
  %1123 = vmatpush1.msra.mxu0 %v257
  %1124 = vmatprep.subr.mxu0 %v262
  %1125 = vmatpush1.msra.mxu0 %v261
  %1126 = vmatprep.subr.mxu0 %v266
  %1127 = vmatpush1.msra.mxu0 %v265
  %1128 = vmatprep.subr.mxu0 %v270
  %1129 = vmatpush1.msra.mxu0 %v269
  %1130 = vmatprep.subr.mxu0 %v274
  %1131 = vmatpush1.msra.mxu0 %v273
  %1132 = vmatprep.subr.mxu0 %v278
  %1133 = vmatpush1.msra.mxu0 %v277
  %1134 = vmatprep.subr.mxu0 %v282
  %1135 = vmatpush1.msra.mxu0 %v281
  %1136 = vmatprep.subr.mxu0 %v286
  %1137 = vmatpush1.msra.mxu0 %v285
  %1138 = vmatprep.subr.mxu0 %v290
  %1139 = vmatpush1.msra.mxu0 %v289
  %1140 = vmatprep.subr.mxu0 %v294
  %1141 = vmatpush1.msra.mxu0 %v293
  %1142 = vmatprep.subr.mxu0 %v298
  %1143 = vmatpush1.msra.mxu0 %v297
  %1144 = vmatprep.subr.mxu0 %v302
  %1145 = vmatpush1.msra.mxu0 %v301
  %1146 = vmatprep.subr.mxu0 %v306
  %1147 = vmatpush1.msra.mxu0 %v305
  %1148 = vmatprep.subr.mxu0 0.0
  %1149 = vmatpush1.msra.mxu0 0.0
  %1150 = vmatprep.subr.mxu0 0.0
  %1151 = vmatpush1.msra.mxu0 0.0
  %1152 = vmatprep.subr.mxu0 0.0
  %1153 = vmatpush1.msra.mxu0 0.0
  %1154 = vmatprep.subr.mxu0 0.0
  %1155 = vmatpush1.msra.mxu0 0.0
  %1156 = vmatprep.subr.mxu0 0.0
  %1157 = vmatpush1.msra.mxu0 0.0
  %1158 = vmatprep.subr.mxu0 0.0
  %1159 = vmatpush1.msra.mxu0 0.0
  %1160 = vmatprep.subr.mxu0 0.0
  %1161 = vmatpush1.msra.mxu0 0.0
  %1162 = vmatprep.subr.mxu0 0.0
  %1163 = vmatpush1.msra.mxu0 0.0
  %1164 = vmatprep.subr.mxu0 0.0
  %1165 = vmatpush1.msra.mxu0 0.0
  %1166 = vmatprep.subr.mxu0 0.0
  %1167 = vmatpush1.msra.mxu0 0.0
  %1168 = vmatprep.subr.mxu0 0.0
  %1169 = vmatpush1.msra.mxu0 0.0
  %1170 = vmatprep.subr.mxu0 0.0
  %1171 = vmatpush1.msra.mxu0 0.0
  %1172 = vmatprep.subr.mxu0 0.0
  %1173 = vmatpush1.msra.mxu0 0.0
  %1174 = vmatprep.subr.mxu0 0.0
  %1175 = vmatpush1.msra.mxu0 0.0
  %1176 = vmatprep.subr.mxu0 0.0
  %1177 = vmatpush1.msra.mxu0 0.0
  %1178 = vmatprep.subr.mxu0 0.0
  %1179 = vmatpush1.msra.mxu0 0.0
  %1180 = vmatprep.mubr.f32.mxu0 0.0
  %1181 = vmatmul.mubr.f32.gmra.mrb[0].mxu0 %v1043
  %v1182 = vpop.f32.mrb[0].mxu0
  %v1183 = vadd.f32 0.0, %v1182
  %v1184 = vpop.f32.mrb[0].mxu0
  %v1185 = vadd.f32 0.0, %v1184
  %1186 = vdwg.mxu0
  %v1187 = vadd.f32 %v162, %v1112
  %v1188 = vadd.f32 %v164, %v1114
  %v1189 = vadd.f32 %v239, %v1183
  %v1190 = vadd.f32 %v241, %v1185
  %v1191 = vxor.u32 %v1187, 2147483648
  %v1192 = vmul.f32 %v1191, 1.442695
  %v1193 = vpow.pop %v1192
  %v1194 = vadd.f32 %v1193, 1.0
  %v1195 = vrcp.pop %v1194
  %v1196 = vmul.f32 1.0, %v1195
  %v1197 = vxor.u32 %v1188, 2147483648
  %v1198 = vmul.f32 %v1197, 1.442695
  %v1199 = vpow.pop %v1198
  %v1200 = vadd.f32 %v1199, 1.0
  %v1201 = vrcp.pop %v1200
  %v1202 = vmul.f32 1.0, %v1201
  %v1203 = vtanh.pop %v1189
  %v1204 = vxor.u32 %v1190, 2147483648
  %v1205 = vmul.f32 %v1204, 1.442695
  %v1206 = vpow.pop %v1205
  %v1207 = vadd.f32 %v1206, 1.0
  %v1208 = vrcp.pop %v1207
  %v1209 = vmul.f32 1.0, %v1208
  %v1211 = vrot.slane %v1038, 6
  %v1213 = vmul.f32 %v1202, %v1211
  %v1214 = vmul.f32 %v1196, %v1203
  %v1215 = vadd.f32 %v1213, %v1214
  %v1216 = vtanh.pop %v1215
  %v1217 = vmul.f32 %v1209, %v1216
  %1218 = vst [vmem:[#allocation2 + $0x8] sm:$0x3] %v1217
  %1219 = vmatprep.subr.mxu0 %v244
  %1220 = vmatpush1.msra.mxu0 %v243
  %1221 = vmatprep.subr.mxu0 %v248
  %1222 = vmatpush1.msra.mxu0 %v247
  %1223 = vmatprep.subr.mxu0 %v252
  %1224 = vmatpush1.msra.mxu0 %v251
  %1225 = vmatprep.subr.mxu0 %v256
  %1226 = vmatpush1.msra.mxu0 %v255
  %1227 = vmatprep.subr.mxu0 %v260
  %1228 = vmatpush1.msra.mxu0 %v259
  %1229 = vmatprep.subr.mxu0 %v264
  %1230 = vmatpush1.msra.mxu0 %v263
  %1231 = vmatprep.subr.mxu0 %v268
  %1232 = vmatpush1.msra.mxu0 %v267
  %1233 = vmatprep.subr.mxu0 %v272
  %1234 = vmatpush1.msra.mxu0 %v271
  %1235 = vmatprep.subr.mxu0 %v276
  %1236 = vmatpush1.msra.mxu0 %v275
  %1237 = vmatprep.subr.mxu0 %v280
  %1238 = vmatpush1.msra.mxu0 %v279
  %1239 = vmatprep.subr.mxu0 %v284
  %1240 = vmatpush1.msra.mxu0 %v283
  %1241 = vmatprep.subr.mxu0 %v288
  %1242 = vmatpush1.msra.mxu0 %v287
  %1243 = vmatprep.subr.mxu0 %v292
  %1244 = vmatpush1.msra.mxu0 %v291
  %1245 = vmatprep.subr.mxu0 %v296
  %1246 = vmatpush1.msra.mxu0 %v295
  %1247 = vmatprep.subr.mxu0 %v300
  %1248 = vmatpush1.msra.mxu0 %v299
  %1249 = vmatprep.subr.mxu0 %v304
  %1250 = vmatpush1.msra.mxu0 %v303
  %1251 = vmatprep.subr.mxu0 0.0
  %1252 = vmatpush1.msra.mxu0 0.0
  %1253 = vmatprep.subr.mxu0 0.0
  %1254 = vmatpush1.msra.mxu0 0.0
  %1255 = vmatprep.subr.mxu0 0.0
  %1256 = vmatpush1.msra.mxu0 0.0
  %1257 = vmatprep.subr.mxu0 0.0
  %1258 = vmatpush1.msra.mxu0 0.0
  %1259 = vmatprep.subr.mxu0 0.0
  %1260 = vmatpush1.msra.mxu0 0.0
  %1261 = vmatprep.subr.mxu0 0.0
  %1262 = vmatpush1.msra.mxu0 0.0
  %1263 = vmatprep.subr.mxu0 0.0
  %1264 = vmatpush1.msra.mxu0 0.0
  %1265 = vmatprep.subr.mxu0 0.0
  %1266 = vmatpush1.msra.mxu0 0.0
  %1267 = vmatprep.subr.mxu0 0.0
  %1268 = vmatpush1.msra.mxu0 0.0
  %1269 = vmatprep.subr.mxu0 0.0
  %1270 = vmatpush1.msra.mxu0 0.0
  %1271 = vmatprep.subr.mxu0 0.0
  %1272 = vmatpush1.msra.mxu0 0.0
  %1273 = vmatprep.subr.mxu0 0.0
  %1274 = vmatpush1.msra.mxu0 0.0
  %1275 = vmatprep.subr.mxu0 0.0
  %1276 = vmatpush1.msra.mxu0 0.0
  %1277 = vmatprep.subr.mxu0 0.0
  %1278 = vmatpush1.msra.mxu0 0.0
  %1279 = vmatprep.subr.mxu0 0.0
  %1280 = vmatpush1.msra.mxu0 0.0
  %1281 = vmatprep.subr.mxu0 0.0
  %1282 = vmatpush1.msra.mxu0 0.0
  %1283 = vmatprep.mubr.f32.mxu0 0.0
  %1284 = vmatmul.mubr.f32.gmra.mrb[0].mxu0 %v1217
  %v1285 = vpop.f32.mrb[0].mxu0
  %v1286 = vadd.f32 0.0, %v1285
  %v1287 = vpop.f32.mrb[0].mxu0
  %v1288 = vadd.f32 0.0, %v1287
  %1289 = vdwg.mxu0
  %1290 = vmatprep.subr.mxu0 %v246
  %1291 = vmatpush1.msra.mxu0 %v245
  %1292 = vmatprep.subr.mxu0 %v250
  %1293 = vmatpush1.msra.mxu0 %v249
  %1294 = vmatprep.subr.mxu0 %v254
  %1295 = vmatpush1.msra.mxu0 %v253
  %1296 = vmatprep.subr.mxu0 %v258
  %1297 = vmatpush1.msra.mxu0 %v257
  %1298 = vmatprep.subr.mxu0 %v262
  %1299 = vmatpush1.msra.mxu0 %v261
  %1300 = vmatprep.subr.mxu0 %v266
  %1301 = vmatpush1.msra.mxu0 %v265
  %1302 = vmatprep.subr.mxu0 %v270
  %1303 = vmatpush1.msra.mxu0 %v269
  %1304 = vmatprep.subr.mxu0 %v274
  %1305 = vmatpush1.msra.mxu0 %v273
  %1306 = vmatprep.subr.mxu0 %v278
  %1307 = vmatpush1.msra.mxu0 %v277
  %1308 = vmatprep.subr.mxu0 %v282
  %1309 = vmatpush1.msra.mxu0 %v281
  %1310 = vmatprep.subr.mxu0 %v286
  %1311 = vmatpush1.msra.mxu0 %v285
  %1312 = vmatprep.subr.mxu0 %v290
  %1313 = vmatpush1.msra.mxu0 %v289
  %1314 = vmatprep.subr.mxu0 %v294
  %1315 = vmatpush1.msra.mxu0 %v293
  %1316 = vmatprep.subr.mxu0 %v298
  %1317 = vmatpush1.msra.mxu0 %v297
  %1318 = vmatprep.subr.mxu0 %v302
  %1319 = vmatpush1.msra.mxu0 %v301
  %1320 = vmatprep.subr.mxu0 %v306
  %1321 = vmatpush1.msra.mxu0 %v305
  %1322 = vmatprep.subr.mxu0 0.0
  %1323 = vmatpush1.msra.mxu0 0.0
  %1324 = vmatprep.subr.mxu0 0.0
  %1325 = vmatpush1.msra.mxu0 0.0
  %1326 = vmatprep.subr.mxu0 0.0
  %1327 = vmatpush1.msra.mxu0 0.0
  %1328 = vmatprep.subr.mxu0 0.0
  %1329 = vmatpush1.msra.mxu0 0.0
  %1330 = vmatprep.subr.mxu0 0.0
  %1331 = vmatpush1.msra.mxu0 0.0
  %1332 = vmatprep.subr.mxu0 0.0
  %1333 = vmatpush1.msra.mxu0 0.0
  %1334 = vmatprep.subr.mxu0 0.0
  %1335 = vmatpush1.msra.mxu0 0.0
  %1336 = vmatprep.subr.mxu0 0.0
  %1337 = vmatpush1.msra.mxu0 0.0
  %1338 = vmatprep.subr.mxu0 0.0
  %1339 = vmatpush1.msra.mxu0 0.0
  %1340 = vmatprep.subr.mxu0 0.0
  %1341 = vmatpush1.msra.mxu0 0.0
  %1342 = vmatprep.subr.mxu0 0.0
  %1343 = vmatpush1.msra.mxu0 0.0
  %1344 = vmatprep.subr.mxu0 0.0
  %1345 = vmatpush1.msra.mxu0 0.0
  %1346 = vmatprep.subr.mxu0 0.0
  %1347 = vmatpush1.msra.mxu0 0.0
  %1348 = vmatprep.subr.mxu0 0.0
  %1349 = vmatpush1.msra.mxu0 0.0
  %1350 = vmatprep.subr.mxu0 0.0
  %1351 = vmatpush1.msra.mxu0 0.0
  %1352 = vmatprep.subr.mxu0 0.0
  %1353 = vmatpush1.msra.mxu0 0.0
  %1354 = vmatprep.mubr.f32.mxu0 0.0
  %1355 = vmatmul.mubr.f32.gmra.mrb[0].mxu0 %v1217
  %v1356 = vpop.f32.mrb[0].mxu0
  %v1357 = vadd.f32 0.0, %v1356
  %v1358 = vpop.f32.mrb[0].mxu0
  %v1359 = vadd.f32 0.0, %v1358
  %1360 = vdwg.mxu0
  %v1365 = vrot.slane %v1286, 6
  %v1366 = vrot.slane %v1288, 6
  %v1367 = vrot.slane %v1357, 6
  %v1368 = vrot.slane %v1359, 6
  %v1373 = vadd.f32 %v162, %v1365
  %v1374 = vadd.f32 %v164, %v1366
  %v1375 = vadd.f32 %v239, %v1367
  %v1376 = vadd.f32 %v241, %v1368
  %v1377 = vxor.u32 %v1373, 2147483648
  %v1378 = vmul.f32 %v1377, 1.442695
  %v1379 = vpow.pop %v1378
  %v1380 = vadd.f32 %v1379, 1.0
  %v1381 = vrcp.pop %v1380
  %v1382 = vmul.f32 1.0, %v1381
  %v1383 = vxor.u32 %v1374, 2147483648
  %v1384 = vmul.f32 %v1383, 1.442695
  %v1385 = vpow.pop %v1384
  %v1386 = vadd.f32 %v1385, 1.0
  %v1387 = vrcp.pop %v1386
  %v1388 = vmul.f32 1.0, %v1387
  %v1389 = vtanh.pop %v1375
  %v1390 = vxor.u32 %v1376, 2147483648
  %v1391 = vmul.f32 %v1390, 1.442695
  %v1392 = vpow.pop %v1391
  %v1393 = vadd.f32 %v1392, 1.0
  %v1394 = vrcp.pop %v1393
  %v1395 = vmul.f32 1.0, %v1394
  %v1397 = vrot.slane %v1215, 6
  %v1399 = vmul.f32 %v1388, %v1397
  %v1400 = vmul.f32 %v1382, %v1389
  %v1401 = vadd.f32 %v1399, %v1400
  %v1402 = vtanh.pop %v1401
  %v1403 = vmul.f32 %v1395, %v1402
  %1404 = vst [vmem:[#allocation2 + $0x8] sm:$0xc] %v1403
  %v1406 = vrot.slane %v1403, 2
  %1408 = vmatprep.subr.mxu0 %v244
  %1409 = vmatpush1.msra.mxu0 %v243
  %1410 = vmatprep.subr.mxu0 %v248
  %1411 = vmatpush1.msra.mxu0 %v247
  %1412 = vmatprep.subr.mxu0 %v252
  %1413 = vmatpush1.msra.mxu0 %v251
  %1414 = vmatprep.subr.mxu0 %v256
  %1415 = vmatpush1.msra.mxu0 %v255
  %1416 = vmatprep.subr.mxu0 %v260
  %1417 = vmatpush1.msra.mxu0 %v259
  %1418 = vmatprep.subr.mxu0 %v264
  %1419 = vmatpush1.msra.mxu0 %v263
  %1420 = vmatprep.subr.mxu0 %v268
  %1421 = vmatpush1.msra.mxu0 %v267
  %1422 = vmatprep.subr.mxu0 %v272
  %1423 = vmatpush1.msra.mxu0 %v271
  %1424 = vmatprep.subr.mxu0 %v276
  %1425 = vmatpush1.msra.mxu0 %v275
  %1426 = vmatprep.subr.mxu0 %v280
  %1427 = vmatpush1.msra.mxu0 %v279
  %1428 = vmatprep.subr.mxu0 %v284
  %1429 = vmatpush1.msra.mxu0 %v283
  %1430 = vmatprep.subr.mxu0 %v288
  %1431 = vmatpush1.msra.mxu0 %v287
  %1432 = vmatprep.subr.mxu0 %v292
  %1433 = vmatpush1.msra.mxu0 %v291
  %1434 = vmatprep.subr.mxu0 %v296
  %1435 = vmatpush1.msra.mxu0 %v295
  %1436 = vmatprep.subr.mxu0 %v300
  %1437 = vmatpush1.msra.mxu0 %v299
  %1438 = vmatprep.subr.mxu0 %v304
  %1439 = vmatpush1.msra.mxu0 %v303
  %1440 = vmatprep.subr.mxu0 0.0
  %1441 = vmatpush1.msra.mxu0 0.0
  %1442 = vmatprep.subr.mxu0 0.0
  %1443 = vmatpush1.msra.mxu0 0.0
  %1444 = vmatprep.subr.mxu0 0.0
  %1445 = vmatpush1.msra.mxu0 0.0
  %1446 = vmatprep.subr.mxu0 0.0
  %1447 = vmatpush1.msra.mxu0 0.0
  %1448 = vmatprep.subr.mxu0 0.0
  %1449 = vmatpush1.msra.mxu0 0.0
  %1450 = vmatprep.subr.mxu0 0.0
  %1451 = vmatpush1.msra.mxu0 0.0
  %1452 = vmatprep.subr.mxu0 0.0
  %1453 = vmatpush1.msra.mxu0 0.0
  %1454 = vmatprep.subr.mxu0 0.0
  %1455 = vmatpush1.msra.mxu0 0.0
  %1456 = vmatprep.subr.mxu0 0.0
  %1457 = vmatpush1.msra.mxu0 0.0
  %1458 = vmatprep.subr.mxu0 0.0
  %1459 = vmatpush1.msra.mxu0 0.0
  %1460 = vmatprep.subr.mxu0 0.0
  %1461 = vmatpush1.msra.mxu0 0.0
  %1462 = vmatprep.subr.mxu0 0.0
  %1463 = vmatpush1.msra.mxu0 0.0
  %1464 = vmatprep.subr.mxu0 0.0
  %1465 = vmatpush1.msra.mxu0 0.0
  %1466 = vmatprep.subr.mxu0 0.0
  %1467 = vmatpush1.msra.mxu0 0.0
  %1468 = vmatprep.subr.mxu0 0.0
  %1469 = vmatpush1.msra.mxu0 0.0
  %1470 = vmatprep.subr.mxu0 0.0
  %1471 = vmatpush1.msra.mxu0 0.0
  %1472 = vmatprep.mubr.f32.mxu0 0.0
  %1473 = vmatmul.mubr.f32.gmra.mrb[0].mxu0 %v1406
  %v1474 = vpop.f32.mrb[0].mxu0
  %v1475 = vadd.f32 0.0, %v1474
  %v1476 = vpop.f32.mrb[0].mxu0
  %v1477 = vadd.f32 0.0, %v1476
  %1478 = vdwg.mxu0
  %1479 = vmatprep.subr.mxu0 %v246
  %1480 = vmatpush1.msra.mxu0 %v245
  %1481 = vmatprep.subr.mxu0 %v250
  %1482 = vmatpush1.msra.mxu0 %v249
  %1483 = vmatprep.subr.mxu0 %v254
  %1484 = vmatpush1.msra.mxu0 %v253
  %1485 = vmatprep.subr.mxu0 %v258
  %1486 = vmatpush1.msra.mxu0 %v257
  %1487 = vmatprep.subr.mxu0 %v262
  %1488 = vmatpush1.msra.mxu0 %v261
  %1489 = vmatprep.subr.mxu0 %v266
  %1490 = vmatpush1.msra.mxu0 %v265
  %1491 = vmatprep.subr.mxu0 %v270
  %1492 = vmatpush1.msra.mxu0 %v269
  %1493 = vmatprep.subr.mxu0 %v274
  %1494 = vmatpush1.msra.mxu0 %v273
  %1495 = vmatprep.subr.mxu0 %v278
  %1496 = vmatpush1.msra.mxu0 %v277
  %1497 = vmatprep.subr.mxu0 %v282
  %1498 = vmatpush1.msra.mxu0 %v281
  %1499 = vmatprep.subr.mxu0 %v286
  %1500 = vmatpush1.msra.mxu0 %v285
  %1501 = vmatprep.subr.mxu0 %v290
  %1502 = vmatpush1.msra.mxu0 %v289
  %1503 = vmatprep.subr.mxu0 %v294
  %1504 = vmatpush1.msra.mxu0 %v293
  %1505 = vmatprep.subr.mxu0 %v298
  %1506 = vmatpush1.msra.mxu0 %v297
  %1507 = vmatprep.subr.mxu0 %v302
  %1508 = vmatpush1.msra.mxu0 %v301
  %1509 = vmatprep.subr.mxu0 %v306
  %1510 = vmatpush1.msra.mxu0 %v305
  %1511 = vmatprep.subr.mxu0 0.0
  %1512 = vmatpush1.msra.mxu0 0.0
  %1513 = vmatprep.subr.mxu0 0.0
  %1514 = vmatpush1.msra.mxu0 0.0
  %1515 = vmatprep.subr.mxu0 0.0
  %1516 = vmatpush1.msra.mxu0 0.0
  %1517 = vmatprep.subr.mxu0 0.0
  %1518 = vmatpush1.msra.mxu0 0.0
  %1519 = vmatprep.subr.mxu0 0.0
  %1520 = vmatpush1.msra.mxu0 0.0
  %1521 = vmatprep.subr.mxu0 0.0
  %1522 = vmatpush1.msra.mxu0 0.0
  %1523 = vmatprep.subr.mxu0 0.0
  %1524 = vmatpush1.msra.mxu0 0.0
  %1525 = vmatprep.subr.mxu0 0.0
  %1526 = vmatpush1.msra.mxu0 0.0
  %1527 = vmatprep.subr.mxu0 0.0
  %1528 = vmatpush1.msra.mxu0 0.0
  %1529 = vmatprep.subr.mxu0 0.0
  %1530 = vmatpush1.msra.mxu0 0.0
  %1531 = vmatprep.subr.mxu0 0.0
  %1532 = vmatpush1.msra.mxu0 0.0
  %1533 = vmatprep.subr.mxu0 0.0
  %1534 = vmatpush1.msra.mxu0 0.0
  %1535 = vmatprep.subr.mxu0 0.0
  %1536 = vmatpush1.msra.mxu0 0.0
  %1537 = vmatprep.subr.mxu0 0.0
  %1538 = vmatpush1.msra.mxu0 0.0
  %1539 = vmatprep.subr.mxu0 0.0
  %1540 = vmatpush1.msra.mxu0 0.0
  %1541 = vmatprep.subr.mxu0 0.0
  %1542 = vmatpush1.msra.mxu0 0.0
  %1543 = vmatprep.mubr.f32.mxu0 0.0
  %1544 = vmatmul.mubr.f32.gmra.mrb[0].mxu0 %v1406
  %v1545 = vpop.f32.mrb[0].mxu0
  %v1546 = vadd.f32 0.0, %v1545
  %v1547 = vpop.f32.mrb[0].mxu0
  %v1548 = vadd.f32 0.0, %v1547
  %1549 = vdwg.mxu0
  %v1554 = vrot.slane %v1475, 4
  %v1555 = vrot.slane %v1477, 4
  %v1556 = vrot.slane %v1546, 4
  %v1557 = vrot.slane %v1548, 4
  %v1562 = vadd.f32 %v162, %v1554
  %v1563 = vadd.f32 %v164, %v1555
  %v1564 = vadd.f32 %v239, %v1556
  %v1565 = vadd.f32 %v241, %v1557
  %v1566 = vxor.u32 %v1562, 2147483648
  %v1567 = vmul.f32 %v1566, 1.442695
  %v1568 = vpow.pop %v1567
  %v1569 = vadd.f32 %v1568, 1.0
  %v1570 = vrcp.pop %v1569
  %v1571 = vmul.f32 1.0, %v1570
  %v1572 = vxor.u32 %v1563, 2147483648
  %v1573 = vmul.f32 %v1572, 1.442695
  %v1574 = vpow.pop %v1573
  %v1575 = vadd.f32 %v1574, 1.0
  %v1576 = vrcp.pop %v1575
  %v1577 = vmul.f32 1.0, %v1576
  %v1578 = vtanh.pop %v1564
  %v1579 = vxor.u32 %v1565, 2147483648
  %v1580 = vmul.f32 %v1579, 1.442695
  %v1581 = vpow.pop %v1580
  %v1582 = vadd.f32 %v1581, 1.0
  %v1583 = vrcp.pop %v1582
  %v1584 = vmul.f32 1.0, %v1583
  %v1586 = vrot.slane %v1401, 6
  %v1588 = vmul.f32 %v1577, %v1586
  %v1589 = vmul.f32 %v1571, %v1578
  %v1590 = vadd.f32 %v1588, %v1589
  %v1591 = vtanh.pop %v1590
  %v1592 = vmul.f32 %v1584, %v1591
  %1593 = vst [vmem:[#allocation2 + $0x8] sm:$0x30] %v1592
  %v1595 = vrot.slane %v1592, 4
  %1597 = vmatprep.subr.mxu0 %v244
  %1598 = vmatpush1.msra.mxu0 %v243
  %1599 = vmatprep.subr.mxu0 %v248
  %1600 = vmatpush1.msra.mxu0 %v247
  %1601 = vmatprep.subr.mxu0 %v252
  %1602 = vmatpush1.msra.mxu0 %v251
  %1603 = vmatprep.subr.mxu0 %v256
  %1604 = vmatpush1.msra.mxu0 %v255
  %1605 = vmatprep.subr.mxu0 %v260
  %1606 = vmatpush1.msra.mxu0 %v259
  %1607 = vmatprep.subr.mxu0 %v264
  %1608 = vmatpush1.msra.mxu0 %v263
  %1609 = vmatprep.subr.mxu0 %v268
  %1610 = vmatpush1.msra.mxu0 %v267
  %1611 = vmatprep.subr.mxu0 %v272
  %1612 = vmatpush1.msra.mxu0 %v271
  %1613 = vmatprep.subr.mxu0 %v276
  %1614 = vmatpush1.msra.mxu0 %v275
  %1615 = vmatprep.subr.mxu0 %v280
  %1616 = vmatpush1.msra.mxu0 %v279
  %1617 = vmatprep.subr.mxu0 %v284
  %1618 = vmatpush1.msra.mxu0 %v283
  %1619 = vmatprep.subr.mxu0 %v288
  %1620 = vmatpush1.msra.mxu0 %v287
  %1621 = vmatprep.subr.mxu0 %v292
  %1622 = vmatpush1.msra.mxu0 %v291
  %1623 = vmatprep.subr.mxu0 %v296
  %1624 = vmatpush1.msra.mxu0 %v295
  %1625 = vmatprep.subr.mxu0 %v300
  %1626 = vmatpush1.msra.mxu0 %v299
  %1627 = vmatprep.subr.mxu0 %v304
  %1628 = vmatpush1.msra.mxu0 %v303
  %1629 = vmatprep.subr.mxu0 0.0
  %1630 = vmatpush1.msra.mxu0 0.0
  %1631 = vmatprep.subr.mxu0 0.0
  %1632 = vmatpush1.msra.mxu0 0.0
  %1633 = vmatprep.subr.mxu0 0.0
  %1634 = vmatpush1.msra.mxu0 0.0
  %1635 = vmatprep.subr.mxu0 0.0
  %1636 = vmatpush1.msra.mxu0 0.0
  %1637 = vmatprep.subr.mxu0 0.0
  %1638 = vmatpush1.msra.mxu0 0.0
  %1639 = vmatprep.subr.mxu0 0.0
  %1640 = vmatpush1.msra.mxu0 0.0
  %1641 = vmatprep.subr.mxu0 0.0
  %1642 = vmatpush1.msra.mxu0 0.0
  %1643 = vmatprep.subr.mxu0 0.0
  %1644 = vmatpush1.msra.mxu0 0.0
  %1645 = vmatprep.subr.mxu0 0.0
  %1646 = vmatpush1.msra.mxu0 0.0
  %1647 = vmatprep.subr.mxu0 0.0
  %1648 = vmatpush1.msra.mxu0 0.0
  %1649 = vmatprep.subr.mxu0 0.0
  %1650 = vmatpush1.msra.mxu0 0.0
  %1651 = vmatprep.subr.mxu0 0.0
  %1652 = vmatpush1.msra.mxu0 0.0
  %1653 = vmatprep.subr.mxu0 0.0
  %1654 = vmatpush1.msra.mxu0 0.0
  %1655 = vmatprep.subr.mxu0 0.0
  %1656 = vmatpush1.msra.mxu0 0.0
  %1657 = vmatprep.subr.mxu0 0.0
  %1658 = vmatpush1.msra.mxu0 0.0
  %1659 = vmatprep.subr.mxu0 0.0
  %1660 = vmatpush1.msra.mxu0 0.0
  %1661 = vmatprep.mubr.f32.mxu0 0.0
  %1662 = vmatmul.mubr.f32.gmra.mrb[0].mxu0 %v1595
  %v1663 = vpop.f32.mrb[0].mxu0
  %v1664 = vadd.f32 0.0, %v1663
  %v1665 = vpop.f32.mrb[0].mxu0
  %v1666 = vadd.f32 0.0, %v1665
  %1667 = vdwg.mxu0
  %1668 = vmatprep.subr.mxu0 %v246
  %1669 = vmatpush1.msra.mxu0 %v245
  %1670 = vmatprep.subr.mxu0 %v250
  %1671 = vmatpush1.msra.mxu0 %v249
  %1672 = vmatprep.subr.mxu0 %v254
  %1673 = vmatpush1.msra.mxu0 %v253
  %1674 = vmatprep.subr.mxu0 %v258
  %1675 = vmatpush1.msra.mxu0 %v257
  %1676 = vmatprep.subr.mxu0 %v262
  %1677 = vmatpush1.msra.mxu0 %v261
  %1678 = vmatprep.subr.mxu0 %v266
  %1679 = vmatpush1.msra.mxu0 %v265
  %1680 = vmatprep.subr.mxu0 %v270
  %1681 = vmatpush1.msra.mxu0 %v269
  %1682 = vmatprep.subr.mxu0 %v274
  %1683 = vmatpush1.msra.mxu0 %v273
  %1684 = vmatprep.subr.mxu0 %v278
  %1685 = vmatpush1.msra.mxu0 %v277
  %1686 = vmatprep.subr.mxu0 %v282
  %1687 = vmatpush1.msra.mxu0 %v281
  %1688 = vmatprep.subr.mxu0 %v286
  %1689 = vmatpush1.msra.mxu0 %v285
  %1690 = vmatprep.subr.mxu0 %v290
  %1691 = vmatpush1.msra.mxu0 %v289
  %1692 = vmatprep.subr.mxu0 %v294
  %1693 = vmatpush1.msra.mxu0 %v293
  %1694 = vmatprep.subr.mxu0 %v298
  %1695 = vmatpush1.msra.mxu0 %v297
  %1696 = vmatprep.subr.mxu0 %v302
  %1697 = vmatpush1.msra.mxu0 %v301
  %1698 = vmatprep.subr.mxu0 %v306
  %1699 = vmatpush1.msra.mxu0 %v305
  %1700 = vmatprep.subr.mxu0 0.0
  %1701 = vmatpush1.msra.mxu0 0.0
  %1702 = vmatprep.subr.mxu0 0.0
  %1703 = vmatpush1.msra.mxu0 0.0
  %1704 = vmatprep.subr.mxu0 0.0
  %1705 = vmatpush1.msra.mxu0 0.0
  %1706 = vmatprep.subr.mxu0 0.0
  %1707 = vmatpush1.msra.mxu0 0.0
  %1708 = vmatprep.subr.mxu0 0.0
  %1709 = vmatpush1.msra.mxu0 0.0
  %1710 = vmatprep.subr.mxu0 0.0
  %1711 = vmatpush1.msra.mxu0 0.0
  %1712 = vmatprep.subr.mxu0 0.0
  %1713 = vmatpush1.msra.mxu0 0.0
  %1714 = vmatprep.subr.mxu0 0.0
  %1715 = vmatpush1.msra.mxu0 0.0
  %1716 = vmatprep.subr.mxu0 0.0
  %1717 = vmatpush1.msra.mxu0 0.0
  %1718 = vmatprep.subr.mxu0 0.0
  %1719 = vmatpush1.msra.mxu0 0.0
  %1720 = vmatprep.subr.mxu0 0.0
  %1721 = vmatpush1.msra.mxu0 0.0
  %1722 = vmatprep.subr.mxu0 0.0
  %1723 = vmatpush1.msra.mxu0 0.0
  %1724 = vmatprep.subr.mxu0 0.0
  %1725 = vmatpush1.msra.mxu0 0.0
  %1726 = vmatprep.subr.mxu0 0.0
  %1727 = vmatpush1.msra.mxu0 0.0
  %1728 = vmatprep.subr.mxu0 0.0
  %1729 = vmatpush1.msra.mxu0 0.0
  %1730 = vmatprep.subr.mxu0 0.0
  %1731 = vmatpush1.msra.mxu0 0.0
  %1732 = vmatprep.mubr.f32.mxu0 0.0
  %1733 = vmatmul.mubr.f32.gmra.mrb[0].mxu0 %v1595
  %v1734 = vpop.f32.mrb[0].mxu0
  %v1735 = vadd.f32 0.0, %v1734
  %v1736 = vpop.f32.mrb[0].mxu0
  %v1737 = vadd.f32 0.0, %v1736
  %1738 = vdwg.mxu0
  %v1743 = vrot.slane %v1664, 2
  %v1744 = vrot.slane %v1666, 2
  %v1745 = vrot.slane %v1735, 2
  %v1746 = vrot.slane %v1737, 2
  %v1751 = vadd.f32 %v162, %v1743
  %v1752 = vadd.f32 %v164, %v1744
  %v1753 = vadd.f32 %v239, %v1745
  %v1754 = vadd.f32 %v241, %v1746
  %v1755 = vxor.u32 %v1751, 2147483648
  %v1756 = vmul.f32 %v1755, 1.442695
  %v1757 = vpow.pop %v1756
  %v1758 = vadd.f32 %v1757, 1.0
  %v1759 = vrcp.pop %v1758
  %v1760 = vmul.f32 1.0, %v1759
  %v1761 = vxor.u32 %v1752, 2147483648
  %v1762 = vmul.f32 %v1761, 1.442695
  %v1763 = vpow.pop %v1762
  %v1764 = vadd.f32 %v1763, 1.0
  %v1765 = vrcp.pop %v1764
  %v1766 = vmul.f32 1.0, %v1765
  %v1767 = vtanh.pop %v1753
  %v1768 = vxor.u32 %v1754, 2147483648
  %v1769 = vmul.f32 %v1768, 1.442695
  %v1770 = vpow.pop %v1769
  %v1771 = vadd.f32 %v1770, 1.0
  %v1772 = vrcp.pop %v1771
  %v1773 = vmul.f32 1.0, %v1772
  %v1775 = vrot.slane %v1590, 6
  %v1777 = vmul.f32 %v1766, %v1775
  %v1778 = vmul.f32 %v1760, %v1767
  %v1779 = vadd.f32 %v1777, %v1778
  %v1780 = vtanh.pop %v1779
  %v1781 = vmul.f32 %v1773, %v1780
  %1782 = vst [vmem:[#allocation2 + $0x8] sm:$0xc0] %v1781
  %1783 = vst [vmem:[%s7 - $0x6] sm:$0xc0] %v1781
  %1784 = vst [vmem:[%s8 - $0x6] sm:$0xc0] %v1779
  %v1785 = vld [vmem:[#allocation2] sm:$0xff]
  %v1786 = vld [vmem:[#allocation2 + $0x8] sm:$0xff]
  %v1787 = vld [vmem:[%s4] sm:$0xff]
  %v1788 = vld [vmem:[%s4 + $0x8] sm:$0xff]
  %v1789 = vld [vmem:[%s4 + $0x10] sm:$0xff]
  %v1790 = vld [vmem:[%s4 + $0x18] sm:$0xff]
  %v1791 = vld [vmem:[%s4 + $0x20] sm:$0xff]
  %v1792 = vld [vmem:[%s4 + $0x28] sm:$0xff]
  %v1793 = vld [vmem:[%s4 + $0x30] sm:$0xff]
  %v1794 = vld [vmem:[%s4 + $0x38] sm:$0xff]
  %v1795 = vld [vmem:[%s4 + $0x40] sm:$0xff]
  %v1796 = vld [vmem:[%s4 + $0x48] sm:$0xff]
  %v1797 = vld [vmem:[%s4 + $0x50] sm:$0xff]
  %v1798 = vld [vmem:[%s4 + $0x58] sm:$0xff]
  %v1799 = vld [vmem:[%s4 + $0x60] sm:$0xff]
  %v1800 = vld [vmem:[%s4 + $0x68] sm:$0xff]
  %v1801 = vld [vmem:[%s4 + $0x70] sm:$0xff]
  %v1802 = vld [vmem:[%s4 + $0x78] sm:$0xff]
  %v1803 = vld [vmem:[%s5] sm:$0x1]
  %v1805 = vlaneseq
  %v1806 = vshrl.u32 %v1805, 7
  %v1807 = vsub.s32 0, %v1806
  %v1808 = vrot.slane %v1803, %v1807
  %1810 = vmatprep.subr.mxu0 0.0
  %1811 = vmatpush1.msra.mxu0 %v1787
  %1812 = vmatprep.subr.mxu0 0.0
  %1813 = vmatpush1.msra.mxu0 %v1788
  %1814 = vmatprep.subr.mxu0 0.0
  %1815 = vmatpush1.msra.mxu0 %v1789
  %1816 = vmatprep.subr.mxu0 0.0
  %1817 = vmatpush1.msra.mxu0 %v1790
  %1818 = vmatprep.subr.mxu0 0.0
  %1819 = vmatpush1.msra.mxu0 %v1791
  %1820 = vmatprep.subr.mxu0 0.0
  %1821 = vmatpush1.msra.mxu0 %v1792
  %1822 = vmatprep.subr.mxu0 0.0
  %1823 = vmatpush1.msra.mxu0 %v1793
  %1824 = vmatprep.subr.mxu0 0.0
  %1825 = vmatpush1.msra.mxu0 %v1794
  %1826 = vmatprep.subr.mxu0 0.0
  %1827 = vmatpush1.msra.mxu0 %v1795
  %1828 = vmatprep.subr.mxu0 0.0
  %1829 = vmatpush1.msra.mxu0 %v1796
  %1830 = vmatprep.subr.mxu0 0.0
  %1831 = vmatpush1.msra.mxu0 %v1797
  %1832 = vmatprep.subr.mxu0 0.0
  %1833 = vmatpush1.msra.mxu0 %v1798
  %1834 = vmatprep.subr.mxu0 0.0
  %1835 = vmatpush1.msra.mxu0 %v1799
  %1836 = vmatprep.subr.mxu0 0.0
  %1837 = vmatpush1.msra.mxu0 %v1800
  %1838 = vmatprep.subr.mxu0 0.0
  %1839 = vmatpush1.msra.mxu0 %v1801
  %1840 = vmatprep.subr.mxu0 0.0
  %1841 = vmatpush1.msra.mxu0 %v1802
  %1842 = vmatprep.subr.mxu0 0.0
  %1843 = vmatpush1.msra.mxu0 0.0
  %1844 = vmatprep.subr.mxu0 0.0
  %1845 = vmatpush1.msra.mxu0 0.0
  %1846 = vmatprep.subr.mxu0 0.0
  %1847 = vmatpush1.msra.mxu0 0.0
  %1848 = vmatprep.subr.mxu0 0.0
  %1849 = vmatpush1.msra.mxu0 0.0
  %1850 = vmatprep.subr.mxu0 0.0
  %1851 = vmatpush1.msra.mxu0 0.0
  %1852 = vmatprep.subr.mxu0 0.0
  %1853 = vmatpush1.msra.mxu0 0.0
  %1854 = vmatprep.subr.mxu0 0.0
  %1855 = vmatpush1.msra.mxu0 0.0
  %1856 = vmatprep.subr.mxu0 0.0
  %1857 = vmatpush1.msra.mxu0 0.0
  %1858 = vmatprep.subr.mxu0 0.0
  %1859 = vmatpush1.msra.mxu0 0.0
  %1860 = vmatprep.subr.mxu0 0.0
  %1861 = vmatpush1.msra.mxu0 0.0
  %1862 = vmatprep.subr.mxu0 0.0
  %1863 = vmatpush1.msra.mxu0 0.0
  %1864 = vmatprep.subr.mxu0 0.0
  %1865 = vmatpush1.msra.mxu0 0.0
  %1866 = vmatprep.subr.mxu0 0.0
  %1867 = vmatpush1.msra.mxu0 0.0
  %1868 = vmatprep.subr.mxu0 0.0
  %1869 = vmatpush1.msra.mxu0 0.0
  %1870 = vmatprep.subr.mxu0 0.0
  %1871 = vmatpush1.msra.mxu0 0.0
  %1872 = vmatprep.subr.mxu0 0.0
  %1873 = vmatpush1.msra.mxu0 0.0
  %1874 = vmatprep.mubr.f32.mxu0 0.0
  %1875 = vmatmul.mubr.f32.gmra.mrb[0].mxu0 %v1785
  %v1876 = vpop.f32.mrb[0].mxu0
  %v1877 = vadd.f32 %v1808, %v1876
  %v1878 = vpop.f32.mrb[0].mxu0
  %1879 = vmatprep.mubr.f32.mxu0 0.0
  %1880 = vmatmul.mubr.f32.gmra.mrb[0].mxu0 %v1786
  %v1881 = vpop.f32.mrb[0].mxu0
  %v1882 = vadd.f32 %v1808, %v1881
  %v1883 = vpop.f32.mrb[0].mxu0
  %1884 = vdwg.mxu0
  %1885 = vst [vmem:[%s6] sm:$0xff] %v1877
  %1886 = vst [vmem:[%s6 + $0x8] sm:$0xff] %v1882
  // Predicated region
  $region26: #{lstm_model_forward.1} parent=0 // pred_check
    _
  $region27: #{lstm_model_forward.1} parent=0 // pred_check_branch
    %1888 = sbr.rel (0) target = $region29
  $region28: #{lstm_model_forward.1} parent=0 // pred_region
    _
  $region29: #{lstm_model_forward.1} parent=0 // pred_fallthru
    _
  // Predicated region
  $region30: #{lstm_model_forward.1} parent=0 // pred_check
    _
  $region31: #{lstm_model_forward.1} parent=0 // pred_check_branch
    %1890 = sbr.rel (0) target = $region33
  $region32: #{lstm_model_forward.1} parent=0 // pred_region
    _
  $region33: #{lstm_model_forward.1} parent=0 // pred_fallthru
    _
  // Predicated region
  $region34: #{lstm_model_forward.1} parent=0 // pred_check
    _
  $region35: #{lstm_model_forward.1} parent=0 // pred_check_branch
    %1892 = sbr.rel (0) target = $region37
  $region36: #{lstm_model_forward.1} parent=0 // pred_region
    _
  $region37: #{lstm_model_forward.1} parent=0 // pred_fallthru
    _
  // Predicated region
  $region38: #{lstm_model_forward.1} parent=0 // pred_check
    _
  $region39: #{lstm_model_forward.1} parent=0 // pred_check_branch
    %1894 = sbr.rel (0) target = $region41
  $region40: #{lstm_model_forward.1} parent=0 // pred_region
    _
  $region41: #{lstm_model_forward.1} parent=0 // pred_fallthru
    _
  // Predicated region
  $region42: #{lstm_model_forward.1} parent=0 // pred_check
    _
  $region43: #{lstm_model_forward.1} parent=0 // pred_check_branch
    %1896 = sbr.rel (0) target = $region45
  $region44: #{lstm_model_forward.1} parent=0 // pred_region
    _
  $region45: #{lstm_model_forward.1} parent=0 // pred_fallthru
    _
  // Predicated region
  $region46: #{lstm_model_forward.1} parent=0 // pred_check
    _
  $region47: #{lstm_model_forward.1} parent=0 // pred_check_branch
    %1898 = sbr.rel (0) target = $region49
  $region48: #{lstm_model_forward.1} parent=0 // pred_region
    _
  $region49: #{lstm_model_forward.1} parent=0 // pred_fallthru
    _

</llo_original>
